<compile_context>
chip_gen: v7x
topology: tpu7x:2x2x1
jax: 0.10.0
libtpu: 0.0.40
codegen_flags: <defaults>
</compile_context>

<pallas_src>
import math

import jax
import jax.numpy as jnp
from jax.experimental import pallas as pl
from jax.experimental.pallas import tpu as pltpu


# ---------------------------------------------------------------------------
# Parameters (torch nn.Linear layout: weight (out, in), bias (out,))
# ---------------------------------------------------------------------------
def _linear_init(key, out_dim, in_dim):
    kw, kb = jax.random.split(key)
    bound = 1.0 / math.sqrt(in_dim)
    w = jax.random.uniform(kw, (out_dim, in_dim), jnp.float32, -bound, bound)
    b = jax.random.uniform(kb, (out_dim,), jnp.float32, -bound, bound)
    return w, b


def init_pinn_moe_params(key):
    """Deterministic parameters matching PINN_MOE's layer shapes (torch layout)."""
    keys = iter(jax.random.split(key, 32))
    p = {}
    # Decoupling = MultiHeadAttention(input_dim=11, output_dim=12, heads=4, head_dim=24).
    # Q/K cancel from the forward output (single attention position); only value/fc_out matter.
    p["dec_value_w"], p["dec_value_b"] = _linear_init(next(keys), 4 * 24, 10)
    p["dec_fc_out_w"], p["dec_fc_out_b"] = _linear_init(next(keys), 11, 4 * 24)
    # MixtureOfExperts(input_dim=12, num_experts=3, expert_hidden_dim=2): 12->4->8->16->8->2
    dims = (12, 4, 8, 16, 8, 2)
    for e in range(3):
        for l in range(5):
            p[f"expert{e}_l{l}_w"], p[f"expert{e}_l{l}_b"] = _linear_init(
                next(keys), dims[l + 1], dims[l])
    p["moe_gate_w"], p["moe_gate_b"] = _linear_init(next(keys), 3, 12)   # unused by kernel
    p["moe_out_w"], p["moe_out_b"] = _linear_init(next(keys), 1, 2)      # unused by kernel
    # physics head: 6 -> 32 -> 16 -> 1
    p["phys_0_w"], p["phys_0_b"] = _linear_init(next(keys), 32, 6)
    p["phys_1_w"], p["phys_1_b"] = _linear_init(next(keys), 16, 32)
    p["phys_2_w"], p["phys_2_b"] = _linear_init(next(keys), 1, 16)
    p["parameter_heat"] = jnp.asarray(1.0, jnp.float32)
    p["parameter_electricity1"] = jnp.asarray(1.0, jnp.float32)
    p["parameter_electricity2"] = jnp.asarray(1.0, jnp.float32)
    return p


# ---------------------------------------------------------------------------
# Constant-slab layout (row offsets are Python ints, baked into the kernel)
# ---------------------------------------------------------------------------
_SLAB_W = 128


def _offsets(entries):
    off, r = {}, 0
    for name, rows in entries:
        off[name] = r
        r += ((rows + 7) // 8) * 8          # every entry starts sublane-tile aligned
    return off, r


_W_OFF, _W_TOTAL = _offsets([
    ("l1", 12), ("l2", 24), ("l3", 48), ("l4", 24), ("l5", 6),
    ("t2", 16), ("t3", 32), ("t4", 16), ("t5", 2),
    ("p1", 32), ("p2", 16), ("p3", 1),
])
_B_OFF, _B_TOTAL = _offsets([
    ("w1t", 12), ("b1", 12), ("b2", 24), ("b3", 48), ("b4", 24), ("b5", 6),
    ("bp1", 32), ("bp2", 16), ("bp3", 1), ("prm", 1),
])


def _block_diag(*mats):
    rows = sum(m.shape[0] for m in mats)
    cols = sum(m.shape[1] for m in mats)
    out = jnp.zeros((rows, cols), jnp.float32)
    r = c = 0
    for m in mats:
        out = out.at[r:r + m.shape[0], c:c + m.shape[1]].set(m.astype(jnp.float32))
        r += m.shape[0]
        c += m.shape[1]
    return out


def _pack_params(params):
    """torch-layout params -> one (rows,128) weight slab + one (rows,1) bias slab."""
    f32 = jnp.float32
    g = lambda k: params[k].astype(f32)

    # Decoupling fold (exact: no nonlinearity between value and fc_out, single token).
    Wd = g("dec_fc_out_w") @ g("dec_value_w")                         # (11, 10)
    bdec = g("dec_fc_out_w") @ g("dec_value_b") + g("dec_fc_out_b")   # (11,)

    # Fused expert layer 1 (all 3 experts share u = [t, dec]); fold the decoupling in.
    W1 = jnp.concatenate([g(f"expert{e}_l0_w") for e in range(3)], axis=0)   # (12, 12)
    b1 = jnp.concatenate([g(f"expert{e}_l0_b") for e in range(3)], axis=0)   # (12,)
    w1t = W1[:, 0]                                                           # d/dt column
    W1xf = W1[:, 1:] @ Wd                                                    # (12, 10)
    b1f = W1[:, 1:] @ bdec + b1                                              # (12,)

    # Block-diagonal fused expert layers 2..5.
    W2 = _block_diag(*[g(f"expert{e}_l1_w") for e in range(3)])              # (24, 12)
    b2 = jnp.concatenate([g(f"expert{e}_l1_b") for e in range(3)])
    W3 = _block_diag(*[g(f"expert{e}_l2_w") for e in range(3)])              # (48, 24)
    b3 = jnp.concatenate([g(f"expert{e}_l2_b") for e in range(3)])
    W4 = _block_diag(*[g(f"expert{e}_l3_w") for e in range(3)])              # (24, 48)
    b4 = jnp.concatenate([g(f"expert{e}_l3_b") for e in range(3)])
    W5 = _block_diag(*[g(f"expert{e}_l4_w") for e in range(3)])              # (6, 24)
    b5 = jnp.concatenate([g(f"expert{e}_l4_b") for e in range(3)])
    perm = jnp.array([2, 3, 0, 1, 4, 5])      # rows -> [phi, c, T, Q, sigma, f]
    W5p, b5p = W5[perm], b5[perm]

    # Tangent (d/dt) chain for experts 0 (-> T) and 1 (-> c) only.
    T2 = _block_diag(g("expert0_l1_w"), g("expert1_l1_w"))                   # (16, 8)
    T3 = _block_diag(g("expert0_l2_w"), g("expert1_l2_w"))                   # (32, 16)
    T4 = _block_diag(g("expert0_l3_w"), g("expert1_l3_w"))                   # (16, 32)
    T5 = jnp.zeros((2, 16), f32)
    T5 = T5.at[0, 0:8].set(g("expert0_l4_w")[0])                             # -> dT/dt
    T5 = T5.at[1, 8:16].set(g("expert1_l4_w")[1])                            # -> dc/dt

    w_slab = jnp.zeros((_W_TOTAL, _SLAB_W), f32)
    for name, mat in (("l1", W1xf), ("l2", W2), ("l3", W3), ("l4", W4), ("l5", W5p),
                      ("t2", T2), ("t3", T3), ("t4", T4), ("t5", T5),
                      ("p1", g("phys_0_w")), ("p2", g("phys_1_w")), ("p3", g("phys_2_w"))):
        r0 = _W_OFF[name]
        w_slab = w_slab.at[r0:r0 + mat.shape[0], 0:mat.shape[1]].set(mat)

    b_slab = jnp.zeros((_B_TOTAL, 1), f32)
    for name, vec in (("w1t", w1t), ("b1", b1f), ("b2", b2), ("b3", b3), ("b4", b4),
                      ("b5", b5p), ("bp1", g("phys_0_b")), ("bp2", g("phys_1_b")),
                      ("bp3", g("phys_2_b")),
                      ("prm", params["parameter_electricity2"].astype(f32).reshape(1))):
        r0 = _B_OFF[name]
        b_slab = b_slab.at[r0:r0 + vec.shape[0], 0].set(vec)
    return w_slab, b_slab


# ---------------------------------------------------------------------------
# Fused Pallas kernel: one batch-lane tile per grid step, activations (feat, TB)
# ---------------------------------------------------------------------------
def _pinn_moe_kernel(tx_ref, w_ref, b_ref, out_ref):
    f32 = jnp.float32

    def dot(a, bb):
        return jnp.dot(a, bb, preferred_element_type=f32)

    def W(name, rows, cols):
        r0 = _W_OFF[name]
        return w_ref[r0:r0 + rows, 0:cols]

    def Bv(name, rows):
        r0 = _B_OFF[name]
        return b_ref[r0:r0 + rows, :]

    tx = tx_ref[...].astype(f32)                       # (11, TB)  features x batch
    t = tx[0:1, :]                                     # (1, TB)   time channel
    x = tx[1:, :]                                      # (10, TB)

    # Experts layer 1 (3 experts fused; decoupling MHA folded into the weights).
    h1 = Bv("w1t", 12) * t + dot(W("l1", 12, 10), x) + Bv("b1", 12)          # (12, TB)
    a1 = jnp.maximum(h1, 0.0)
    h2 = dot(W("l2", 24, 12), a1) + Bv("b2", 24)
    a2 = jnp.maximum(h2, 0.0)                                                 # (24, TB)
    h3 = dot(W("l3", 48, 24), a2) + Bv("b3", 48)
    a3 = jnp.maximum(h3, 0.0)                                                 # (48, TB)
    h4 = dot(W("l4", 24, 48), a3) + Bv("b4", 24)
    a4 = jnp.maximum(h4, 0.0)                                                 # (24, TB)
    eo = dot(W("l5", 6, 24), a4) + Bv("b5", 6)          # rows: [phi, c, T, Q, sigma, f]

    # Exact forward-mode d/dt for experts 0 (-> T_t) and 1 (-> c_t); expert 2's
    # tangent is never consumed and is skipped.
    g1 = jnp.where(h1[0:8, :] > 0.0, Bv("w1t", 12)[0:8, :], 0.0)              # (8, TB)
    g2 = jnp.where(h2[0:16, :] > 0.0, dot(W("t2", 16, 8), g1), 0.0)           # (16, TB)
    g3 = jnp.where(h3[0:32, :] > 0.0, dot(W("t3", 32, 16), g2), 0.0)          # (32, TB)
    g4 = jnp.where(h4[0:16, :] > 0.0, dot(W("t4", 16, 32), g3), 0.0)          # (16, TB)
    dt = dot(W("t5", 2, 16), g4)                                              # [T_t; c_t]

    T, Q = eo[2:3, :], eo[3:4, :]
    c, f = eo[1:2, :], eo[5:6, :]
    T_t, c_t = dt[0:1, :], dt[1:2, :]
    p_e2 = Bv("prm", 1)                                                       # (1, 1)
    # ReLU experts are piecewise linear in (t, x): every "laplace" term of the torch
    # forward is identically zero, so parameter_heat / parameter_electricity1 drop out.
    loss = (c_t - p_e2) ** 2 + (T_t - Q) ** 2 + f ** 2                        # (1, TB)

    # physics head on [phi, c, T, Q, sigma, f]
    hp1 = jnp.maximum(dot(W("p1", 32, 6), eo) + Bv("bp1", 32), 0.0)
    hp2 = jnp.maximum(dot(W("p2", 16, 32), hp1) + Bv("bp2", 16), 0.0)
    soh = dot(W("p3", 1, 16), hp2) + Bv("bp3", 1)                             # (1, TB)

    # Single lane-dense (8, TB) output slab: [soh, loss, phi, c, T, Q, sigma, f].
    out_ref[...] = jnp.concatenate([soh, loss, eo], axis=0)


# ---------------------------------------------------------------------------
# Wrapper: layout plumbing + pallas_call
# ---------------------------------------------------------------------------
def _round_up(n, m):
    return ((n + m - 1) // m) * m


def pinn_moe_forward(tx, params, *, batch_tile=2048):
    """PINN_MOE forward. Returns (soh, loss_all, [phi, c, T, Q, sigma, f])."""
    B, d_in = tx.shape
    assert d_in == 11, "PINN_MOE expects input_dim=11"
    f32 = jnp.float32

    w_slab, b_slab = _pack_params(params)

    # Lane-on-batch layout: (features, batch), batch padded to a multiple of 128.
    b_lane = _round_up(max(B, 1), 128)
    tb = max(128, min(_round_up(batch_tile, 128), b_lane))
    b_pad = _round_up(b_lane, tb)
    tx_t = jnp.zeros((11, b_pad), f32).at[:, :B].set(tx.astype(f32).T)

    out = pl.pallas_call(
        _pinn_moe_kernel,
        out_shape=jax.ShapeDtypeStruct((8, b_pad), f32),
        grid_spec=pltpu.PrefetchScalarGridSpec(
            num_scalar_prefetch=0,
            grid=(b_pad // tb,),
            in_specs=[
                pl.BlockSpec((11, tb), lambda b: (0, b)),           # input, tiled on lanes
                pl.BlockSpec((_W_TOTAL, _SLAB_W), lambda b: (0, 0)),  # weight slab (resident)
                pl.BlockSpec((_B_TOTAL, 1), lambda b: (0, 0)),        # bias slab (resident)
            ],
            out_specs=pl.BlockSpec((8, tb), lambda b: (0, b)),
        ),
        compiler_params=pltpu.CompilerParams(
            dimension_semantics=("parallel",),   # batch axis can shard across v7x's 2 TCs
        ),
    )(tx_t, w_slab, b_slab)

    soh = out[0, :B].reshape(B, 1)
    loss_all = out[1, :B].reshape(B, 1)
    phi = out[2, :B].reshape(B, 1)
    c = out[3, :B].reshape(B, 1)
    T = out[4, :B].reshape(B, 1)
    Q = out[5, :B].reshape(B, 1)
    sigma = out[6, :B].reshape(B, 1)
    f = out[7, :B].reshape(B, 1)
    return soh, loss_all, [phi, c, T, Q, sigma, f]


# ---------------------------------------------------------------------------
# Pure-JAX reference (real autodiff for dT/dt, dc/dt) for validation
# ---------------------------------------------------------------------------
def _relu(x):
    return jnp.where(x > 0.0, x, 0.0)


def pinn_moe_reference(tx, params):
    tx = tx.astype(jnp.float32)
    t_in, x_in = tx[:, 0:1], tx[:, 1:]
    v = x_in @ params["dec_value_w"].T + params["dec_value_b"]
    dec = v @ params["dec_fc_out_w"].T + params["dec_fc_out_b"]
    u = jnp.concatenate([t_in, dec], axis=1)                      # t_x, (B, 12)

    def expert(e, uu):                                            # (12,) -> (2,)
        a = uu
        for l in range(4):
            a = _relu(a @ params[f"expert{e}_l{l}_w"].T + params[f"expert{e}_l{l}_b"])
        return a @ params[f"expert{e}_l4_w"].T + params[f"expert{e}_l4_b"]

    outs = [jax.vmap(lambda uu, e=e: expert(e, uu))(u) for e in range(3)]
    T, Q = outs[0][:, 0:1], outs[0][:, 1:2]
    phi, c = outs[1][:, 0:1], outs[1][:, 1:2]
    sigma, f = outs[2][:, 0:1], outs[2][:, 1:2]

    T_t = jax.vmap(jax.grad(lambda uu: expert(0, uu)[0]))(u)[:, 0:1]
    c_t = jax.vmap(jax.grad(lambda uu: expert(1, uu)[1]))(u)[:, 0:1]
    p2 = params["parameter_electricity2"]
    # second derivatives of the piecewise-linear ReLU experts are identically zero
    loss_all = (c_t - p2) ** 2 + (T_t - Q) ** 2 + f ** 2

    feat = jnp.concatenate([phi, c, T, Q, sigma, f], axis=1)
    h = _relu(feat @ params["phys_0_w"].T + params["phys_0_b"])
    h = _relu(h @ params["phys_1_w"].T + params["phys_1_b"])
    soh = h @ params["phys_2_w"].T + params["phys_2_b"]
    return soh, loss_all, [phi, c, T, Q, sigma, f]


if __name__ == "__main__":
    key = jax.random.PRNGKey(0)
    k_x, k_p = jax.random.split(key)

    B = 4                                    # small batch consistent with the module
    tx = jax.random.normal(k_x, (B, 11), dtype=jnp.float32)
    params = init_pinn_moe_params(k_p)

    fwd = jax.jit(pinn_moe_forward)
    soh, loss_all, feats = jax.block_until_ready(fwd(tx, params))

    # shape checks (match the torch forward's returns)
    assert soh.shape == (B, 1) and loss_all.shape == (B, 1)
    assert len(feats) == 6 and all(a.shape == (B, 1) for a in feats)

    # numerical check against a pure-JAX autodiff reference
    soh_r, loss_r, feats_r = pinn_moe_reference(tx, params)
    assert jnp.allclose(soh, soh_r, atol=1e-4, rtol=1e-3), "soh mismatch"
    assert jnp.allclose(loss_all, loss_r, atol=1e-4, rtol=1e-3), "loss mismatch"
    for a, b_ in zip(feats, feats_r):
        assert jnp.allclose(a, b_, atol=1e-4, rtol=1e-3), "feature mismatch"

    print("KERNEL_OK")
</pallas_src>

<mosaic_0001>
module attributes {stable_mosaic.version = 11 : i64} {
  func.func @_pinn_moe_kernel(%arg0: i32, %arg1: memref<11x128xf32, #tpu.memory_space<vmem>>, %arg2: memref<248x128xf32, #tpu.memory_space<vmem>>, %arg3: memref<200x1xf32, #tpu.memory_space<vmem>>, %arg4: memref<8x128xf32, #tpu.memory_space<vmem>>) attributes {dimension_semantics = [#tpu.dimension_semantics<parallel>], iteration_bounds = array<i64: 1>, scalar_prefetch = 0 : i64, scratch_operands = 0 : i64, tpu.core_type = #tpu.core_type<tc>, window_params = [{transform_indices = @transform_0, window_bounds = array<i64: 11, 128>}, {pipeline_mode = #tpu.pipeline_mode<synchronous>, transform_indices = @transform_1, window_bounds = array<i64: 248, 128>}, {pipeline_mode = #tpu.pipeline_mode<synchronous>, transform_indices = @transform_2, window_bounds = array<i64: 200, 1>}, {transform_indices = @transform_3, window_bounds = array<i64: 8, 128>}]} {
    %c0 = arith.constant 0 : index
    %c0_0 = arith.constant 0 : index
    %0 = vector.load %arg1[%c0, %c0_0] : memref<11x128xf32, #tpu.memory_space<vmem>>, vector<11x128xf32>
    %1 = vector.extract_strided_slice %0 {offsets = [0, 0], sizes = [1, 128], strides = [1, 1]} : vector<11x128xf32> to vector<1x128xf32>
    %2 = vector.extract_strided_slice %0 {offsets = [1, 0], sizes = [10, 128], strides = [1, 1]} : vector<11x128xf32> to vector<10x128xf32>
    %c0_1 = arith.constant 0 : index
    %c0_2 = arith.constant 0 : index
    %3 = vector.load %arg3[%c0_1, %c0_2] : memref<200x1xf32, #tpu.memory_space<vmem>>, vector<12x1xf32>
    %4 = vector.broadcast %3 : vector<12x1xf32> to vector<12x128xf32>
    %5 = vector.broadcast %1 : vector<1x128xf32> to vector<12x128xf32>
    %6 = arith.mulf %4, %5 : vector<12x128xf32>
    %c0_3 = arith.constant 0 : index
    %c0_4 = arith.constant 0 : index
    %7 = vector.load %arg2[%c0_3, %c0_4] : memref<248x128xf32, #tpu.memory_space<vmem>>, vector<12x10xf32>
    %cst = arith.constant dense<0.000000e+00> : vector<12x128xf32>
    %8 = tpu.matmul %7, %2, %cst {dimension_numbers = #tpu.dot_dimension_numbers<[1], [0], [0], [1], [0, 0, 1, 1], [], []>} : vector<12x10xf32>, vector<10x128xf32>, vector<12x128xf32> -> vector<12x128xf32>
    %9 = arith.addf %6, %8 : vector<12x128xf32>
    %c16 = arith.constant 16 : index
    %c0_5 = arith.constant 0 : index
    %10 = vector.load %arg3[%c16, %c0_5] : memref<200x1xf32, #tpu.memory_space<vmem>>, vector<12x1xf32>
    %11 = vector.broadcast %10 : vector<12x1xf32> to vector<12x128xf32>
    %12 = arith.addf %9, %11 : vector<12x128xf32>
    %cst_6 = arith.constant 0.000000e+00 : f32
    %13 = vector.broadcast %cst_6 : f32 to vector<12x128xf32>
    %14 = arith.maximumf %12, %13 : vector<12x128xf32>
    %c16_7 = arith.constant 16 : index
    %c0_8 = arith.constant 0 : index
    %15 = vector.load %arg2[%c16_7, %c0_8] : memref<248x128xf32, #tpu.memory_space<vmem>>, vector<24x12xf32>
    %cst_9 = arith.constant dense<0.000000e+00> : vector<24x128xf32>
    %16 = tpu.matmul %15, %14, %cst_9 {dimension_numbers = #tpu.dot_dimension_numbers<[1], [0], [0], [1], [0, 0, 1, 1], [], []>} : vector<24x12xf32>, vector<12x128xf32>, vector<24x128xf32> -> vector<24x128xf32>
    %c32 = arith.constant 32 : index
    %c0_10 = arith.constant 0 : index
    %17 = vector.load %arg3[%c32, %c0_10] : memref<200x1xf32, #tpu.memory_space<vmem>>, vector<24x1xf32>
    %18 = vector.broadcast %17 : vector<24x1xf32> to vector<24x128xf32>
    %19 = arith.addf %16, %18 : vector<24x128xf32>
    %cst_11 = arith.constant 0.000000e+00 : f32
    %20 = vector.broadcast %cst_11 : f32 to vector<24x128xf32>
    %21 = arith.maximumf %19, %20 : vector<24x128xf32>
    %c40 = arith.constant 40 : index
    %c0_12 = arith.constant 0 : index
    %22 = vector.load %arg2[%c40, %c0_12] : memref<248x128xf32, #tpu.memory_space<vmem>>, vector<48x24xf32>
    %cst_13 = arith.constant dense<0.000000e+00> : vector<48x128xf32>
    %23 = tpu.matmul %22, %21, %cst_13 {dimension_numbers = #tpu.dot_dimension_numbers<[1], [0], [0], [1], [0, 0, 1, 1], [], []>} : vector<48x24xf32>, vector<24x128xf32>, vector<48x128xf32> -> vector<48x128xf32>
    %c56 = arith.constant 56 : index
    %c0_14 = arith.constant 0 : index
    %24 = vector.load %arg3[%c56, %c0_14] : memref<200x1xf32, #tpu.memory_space<vmem>>, vector<48x1xf32>
    %25 = vector.broadcast %24 : vector<48x1xf32> to vector<48x128xf32>
    %26 = arith.addf %23, %25 : vector<48x128xf32>
    %cst_15 = arith.constant 0.000000e+00 : f32
    %27 = vector.broadcast %cst_15 : f32 to vector<48x128xf32>
    %28 = arith.maximumf %26, %27 : vector<48x128xf32>
    %c88 = arith.constant 88 : index
    %c0_16 = arith.constant 0 : index
    %29 = vector.load %arg2[%c88, %c0_16] : memref<248x128xf32, #tpu.memory_space<vmem>>, vector<24x48xf32>
    %cst_17 = arith.constant dense<0.000000e+00> : vector<24x128xf32>
    %30 = tpu.matmul %29, %28, %cst_17 {dimension_numbers = #tpu.dot_dimension_numbers<[1], [0], [0], [1], [0, 0, 1, 1], [], []>} : vector<24x48xf32>, vector<48x128xf32>, vector<24x128xf32> -> vector<24x128xf32>
    %c104 = arith.constant 104 : index
    %c0_18 = arith.constant 0 : index
    %31 = vector.load %arg3[%c104, %c0_18] : memref<200x1xf32, #tpu.memory_space<vmem>>, vector<24x1xf32>
    %32 = vector.broadcast %31 : vector<24x1xf32> to vector<24x128xf32>
    %33 = arith.addf %30, %32 : vector<24x128xf32>
    %cst_19 = arith.constant 0.000000e+00 : f32
    %34 = vector.broadcast %cst_19 : f32 to vector<24x128xf32>
    %35 = arith.maximumf %33, %34 : vector<24x128xf32>
    %c112 = arith.constant 112 : index
    %c0_20 = arith.constant 0 : index
    %36 = vector.load %arg2[%c112, %c0_20] : memref<248x128xf32, #tpu.memory_space<vmem>>, vector<6x24xf32>
    %cst_21 = arith.constant dense<0.000000e+00> : vector<6x128xf32>
    %37 = tpu.matmul %36, %35, %cst_21 {dimension_numbers = #tpu.dot_dimension_numbers<[1], [0], [0], [1], [0, 0, 1, 1], [], []>} : vector<6x24xf32>, vector<24x128xf32>, vector<6x128xf32> -> vector<6x128xf32>
    %c128 = arith.constant 128 : index
    %c0_22 = arith.constant 0 : index
    %38 = vector.load %arg3[%c128, %c0_22] : memref<200x1xf32, #tpu.memory_space<vmem>>, vector<6x1xf32>
    %39 = vector.broadcast %38 : vector<6x1xf32> to vector<6x128xf32>
    %40 = arith.addf %37, %39 : vector<6x128xf32>
    %41 = vector.extract_strided_slice %12 {offsets = [0, 0], sizes = [8, 128], strides = [1, 1]} : vector<12x128xf32> to vector<8x128xf32>
    %cst_23 = arith.constant 0.000000e+00 : f32
    %42 = vector.broadcast %cst_23 : f32 to vector<8x128xf32>
    %43 = arith.cmpf ogt, %41, %42 : vector<8x128xf32>
    %c0_24 = arith.constant 0 : index
    %c0_25 = arith.constant 0 : index
    %44 = vector.load %arg3[%c0_24, %c0_25] : memref<200x1xf32, #tpu.memory_space<vmem>>, vector<12x1xf32>
    %45 = vector.extract_strided_slice %44 {offsets = [0, 0], sizes = [8, 1], strides = [1, 1]} : vector<12x1xf32> to vector<8x1xf32>
    %cst_26 = arith.constant 0.000000e+00 : f32
    %46 = vector.shape_cast %45 : vector<8x1xf32> to vector<8x1xf32>
    %47 = vector.broadcast %46 : vector<8x1xf32> to vector<8x128xf32>
    %48 = vector.broadcast %cst_26 : f32 to vector<8x128xf32>
    %49 = arith.select %43, %47, %48 : vector<8x128xi1>, vector<8x128xf32>
    %50 = vector.extract_strided_slice %19 {offsets = [0, 0], sizes = [16, 128], strides = [1, 1]} : vector<24x128xf32> to vector<16x128xf32>
    %cst_27 = arith.constant 0.000000e+00 : f32
    %51 = vector.broadcast %cst_27 : f32 to vector<16x128xf32>
    %52 = arith.cmpf ogt, %50, %51 : vector<16x128xf32>
    %c120 = arith.constant 120 : index
    %c0_28 = arith.constant 0 : index
    %53 = vector.load %arg2[%c120, %c0_28] : memref<248x128xf32, #tpu.memory_space<vmem>>, vector<16x8xf32>
    %cst_29 = arith.constant dense<0.000000e+00> : vector<16x128xf32>
    %54 = tpu.matmul %53, %49, %cst_29 {dimension_numbers = #tpu.dot_dimension_numbers<[1], [0], [0], [1], [0, 0, 1, 1], [], []>} : vector<16x8xf32>, vector<8x128xf32>, vector<16x128xf32> -> vector<16x128xf32>
    %cst_30 = arith.constant 0.000000e+00 : f32
    %55 = vector.broadcast %cst_30 : f32 to vector<16x128xf32>
    %56 = arith.select %52, %54, %55 : vector<16x128xi1>, vector<16x128xf32>
    %57 = vector.extract_strided_slice %26 {offsets = [0, 0], sizes = [32, 128], strides = [1, 1]} : vector<48x128xf32> to vector<32x128xf32>
    %cst_31 = arith.constant 0.000000e+00 : f32
    %58 = vector.broadcast %cst_31 : f32 to vector<32x128xf32>
    %59 = arith.cmpf ogt, %57, %58 : vector<32x128xf32>
    %c136 = arith.constant 136 : index
    %c0_32 = arith.constant 0 : index
    %60 = vector.load %arg2[%c136, %c0_32] : memref<248x128xf32, #tpu.memory_space<vmem>>, vector<32x16xf32>
    %cst_33 = arith.constant dense<0.000000e+00> : vector<32x128xf32>
    %61 = tpu.matmul %60, %56, %cst_33 {dimension_numbers = #tpu.dot_dimension_numbers<[1], [0], [0], [1], [0, 0, 1, 1], [], []>} : vector<32x16xf32>, vector<16x128xf32>, vector<32x128xf32> -> vector<32x128xf32>
    %cst_34 = arith.constant 0.000000e+00 : f32
    %62 = vector.broadcast %cst_34 : f32 to vector<32x128xf32>
    %63 = arith.select %59, %61, %62 : vector<32x128xi1>, vector<32x128xf32>
    %64 = vector.extract_strided_slice %33 {offsets = [0, 0], sizes = [16, 128], strides = [1, 1]} : vector<24x128xf32> to vector<16x128xf32>
    %cst_35 = arith.constant 0.000000e+00 : f32
    %65 = vector.broadcast %cst_35 : f32 to vector<16x128xf32>
    %66 = arith.cmpf ogt, %64, %65 : vector<16x128xf32>
    %c168 = arith.constant 168 : index
    %c0_36 = arith.constant 0 : index
    %67 = vector.load %arg2[%c168, %c0_36] : memref<248x128xf32, #tpu.memory_space<vmem>>, vector<16x32xf32>
    %cst_37 = arith.constant dense<0.000000e+00> : vector<16x128xf32>
    %68 = tpu.matmul %67, %63, %cst_37 {dimension_numbers = #tpu.dot_dimension_numbers<[1], [0], [0], [1], [0, 0, 1, 1], [], []>} : vector<16x32xf32>, vector<32x128xf32>, vector<16x128xf32> -> vector<16x128xf32>
    %cst_38 = arith.constant 0.000000e+00 : f32
    %69 = vector.broadcast %cst_38 : f32 to vector<16x128xf32>
    %70 = arith.select %66, %68, %69 : vector<16x128xi1>, vector<16x128xf32>
    %c184 = arith.constant 184 : index
    %c0_39 = arith.constant 0 : index
    %71 = vector.load %arg2[%c184, %c0_39] : memref<248x128xf32, #tpu.memory_space<vmem>>, vector<2x16xf32>
    %cst_40 = arith.constant dense<0.000000e+00> : vector<2x128xf32>
    %72 = tpu.matmul %71, %70, %cst_40 {dimension_numbers = #tpu.dot_dimension_numbers<[1], [0], [0], [1], [0, 0, 1, 1], [], []>} : vector<2x16xf32>, vector<16x128xf32>, vector<2x128xf32> -> vector<2x128xf32>
    %73 = vector.extract_strided_slice %40 {offsets = [3, 0], sizes = [1, 128], strides = [1, 1]} : vector<6x128xf32> to vector<1x128xf32>
    %74 = vector.extract_strided_slice %40 {offsets = [5, 0], sizes = [1, 128], strides = [1, 1]} : vector<6x128xf32> to vector<1x128xf32>
    %75 = vector.extract_strided_slice %72 {offsets = [0, 0], sizes = [1, 128], strides = [1, 1]} : vector<2x128xf32> to vector<1x128xf32>
    %76 = vector.extract_strided_slice %72 {offsets = [1, 0], sizes = [1, 128], strides = [1, 1]} : vector<2x128xf32> to vector<1x128xf32>
    %c192 = arith.constant 192 : index
    %c0_41 = arith.constant 0 : index
    %77 = vector.load %arg3[%c192, %c0_41] : memref<200x1xf32, #tpu.memory_space<vmem>>, vector<1x1xf32>
    %78 = vector.broadcast %77 : vector<1x1xf32> to vector<1x128xf32>
    %79 = arith.subf %76, %78 : vector<1x128xf32>
    %80 = arith.mulf %79, %79 : vector<1x128xf32>
    %81 = arith.subf %75, %73 : vector<1x128xf32>
    %82 = arith.mulf %81, %81 : vector<1x128xf32>
    %83 = arith.addf %80, %82 : vector<1x128xf32>
    %84 = arith.mulf %74, %74 : vector<1x128xf32>
    %85 = arith.addf %83, %84 : vector<1x128xf32>
    %c192_42 = arith.constant 192 : index
    %c0_43 = arith.constant 0 : index
    %86 = vector.load %arg2[%c192_42, %c0_43] : memref<248x128xf32, #tpu.memory_space<vmem>>, vector<32x6xf32>
    %cst_44 = arith.constant dense<0.000000e+00> : vector<32x128xf32>
    %87 = tpu.matmul %86, %40, %cst_44 {dimension_numbers = #tpu.dot_dimension_numbers<[1], [0], [0], [1], [0, 0, 1, 1], [], []>} : vector<32x6xf32>, vector<6x128xf32>, vector<32x128xf32> -> vector<32x128xf32>
    %c136_45 = arith.constant 136 : index
    %c0_46 = arith.constant 0 : index
    %88 = vector.load %arg3[%c136_45, %c0_46] : memref<200x1xf32, #tpu.memory_space<vmem>>, vector<32x1xf32>
    %89 = vector.broadcast %88 : vector<32x1xf32> to vector<32x128xf32>
    %90 = arith.addf %87, %89 : vector<32x128xf32>
    %cst_47 = arith.constant 0.000000e+00 : f32
    %91 = vector.broadcast %cst_47 : f32 to vector<32x128xf32>
    %92 = arith.maximumf %90, %91 : vector<32x128xf32>
    %c224 = arith.constant 224 : index
    %c0_48 = arith.constant 0 : index
    %93 = vector.load %arg2[%c224, %c0_48] : memref<248x128xf32, #tpu.memory_space<vmem>>, vector<16x32xf32>
    %cst_49 = arith.constant dense<0.000000e+00> : vector<16x128xf32>
    %94 = tpu.matmul %93, %92, %cst_49 {dimension_numbers = #tpu.dot_dimension_numbers<[1], [0], [0], [1], [0, 0, 1, 1], [], []>} : vector<16x32xf32>, vector<32x128xf32>, vector<16x128xf32> -> vector<16x128xf32>
    %c168_50 = arith.constant 168 : index
    %c0_51 = arith.constant 0 : index
    %95 = vector.load %arg3[%c168_50, %c0_51] : memref<200x1xf32, #tpu.memory_space<vmem>>, vector<16x1xf32>
    %96 = vector.broadcast %95 : vector<16x1xf32> to vector<16x128xf32>
    %97 = arith.addf %94, %96 : vector<16x128xf32>
    %cst_52 = arith.constant 0.000000e+00 : f32
    %98 = vector.broadcast %cst_52 : f32 to vector<16x128xf32>
    %99 = arith.maximumf %97, %98 : vector<16x128xf32>
    %c240 = arith.constant 240 : index
    %c0_53 = arith.constant 0 : index
    %100 = vector.load %arg2[%c240, %c0_53] : memref<248x128xf32, #tpu.memory_space<vmem>>, vector<1x16xf32>
    %cst_54 = arith.constant dense<0.000000e+00> : vector<1x128xf32>
    %101 = tpu.matmul %100, %99, %cst_54 {dimension_numbers = #tpu.dot_dimension_numbers<[1], [0], [0], [1], [0, 0, 1, 1], [], []>} : vector<1x16xf32>, vector<16x128xf32>, vector<1x128xf32> -> vector<1x128xf32>
    %c184_55 = arith.constant 184 : index
    %c0_56 = arith.constant 0 : index
    %102 = vector.load %arg3[%c184_55, %c0_56] : memref<200x1xf32, #tpu.memory_space<vmem>>, vector<1x1xf32>
    %103 = vector.broadcast %102 : vector<1x1xf32> to vector<1x128xf32>
    %104 = arith.addf %101, %103 : vector<1x128xf32>
    %105 = tpu.concatenate %104, %85, %40 in 0 : vector<1x128xf32>, vector<1x128xf32>, vector<6x128xf32> -> vector<8x128xf32>
    %c0_57 = arith.constant 0 : index
    %c0_58 = arith.constant 0 : index
    %106 = vector.load %arg4[%c0_57, %c0_58] : memref<8x128xf32, #tpu.memory_space<vmem>>, vector<8x128xf32>
    tpu.vector_store %arg4[%c0_57, %c0_58], %105 {strides = array<i32>} : memref<8x128xf32, #tpu.memory_space<vmem>>, vector<8x128xf32>,
    return
  }
  func.func @transform_0(%arg0: i32) -> (i32, i32) {
    %c0_i32 = arith.constant 0 : i32
    %c0_i32_0 = arith.constant 0 : i32
    return %c0_i32, %arg0 : i32, i32
  }
  func.func @transform_1(%arg0: i32) -> (i32, i32) {
    %c0_i32 = arith.constant 0 : i32
    %c0_i32_0 = arith.constant 0 : i32
    %c0_i32_1 = arith.constant 0 : i32
    return %c0_i32, %c0_i32_0 : i32, i32
  }
  func.func @transform_2(%arg0: i32) -> (i32, i32) {
    %c0_i32 = arith.constant 0 : i32
    %c0_i32_0 = arith.constant 0 : i32
    %c0_i32_1 = arith.constant 0 : i32
    return %c0_i32, %c0_i32_0 : i32, i32
  }
  func.func @transform_3(%arg0: i32) -> (i32, i32) {
    %c0_i32 = arith.constant 0 : i32
    %c0_i32_0 = arith.constant 0 : i32
    return %c0_i32, %arg0 : i32, i32
  }
}

</mosaic_0001>

<llo_original>
// kernel: pinn_moe_forward.1
$region0: #{pinn_moe_forward.1}
  #allocation0 [shape = 'u32[]', space=smem, size = 0x4, offset = 0x4, fixed_abs, tag = 'smem constant byte address 0x4 - core index']
  #allocation1 [shape = 'u32[144,128]{1,0:T(1,128)}', space=vmem, size = 0x12000, scoped, tag = 'internal scratch']
  %s0 = inlined_call_operand.vmem [shape: f32[11,128], index: 0, kind: input, shape index: {}]
  %s1 = inlined_call_operand.vmem [shape: f32[248,128], index: 1, kind: input, shape index: {}]
  %s2 = inlined_call_operand.vmem [shape: f32[200,1], index: 2, kind: input, shape index: {}]
  %s3 = inlined_call_operand.vmem [shape: f32[8,128], index: 3, kind: output, shape index: {}]
  %s4 = sld [smem:[#allocation0]]
  $region22: #{pinn_moe_forward.1} parent=0
    _
  %s6 = ssub.s32 1, %s4
  %s7 = scalar_select 0, %s6, %s4
  // Predicated region
  $region2: #{pinn_moe_forward.1} parent=0 // pred_check
    _
  $region3: #{pinn_moe_forward.1} parent=0 // pred_check_branch
    %9 = sbr.rel (0) target = $region5
  $region4: #{pinn_moe_forward.1} parent=0 // pred_region
    _
  $region5: #{pinn_moe_forward.1} parent=0 // pred_fallthru
    _
  // Predicated region
  $region6: #{pinn_moe_forward.1} parent=0 // pred_check
    _
  $region7: #{pinn_moe_forward.1} parent=0 // pred_check_branch
    %11 = sbr.rel (0) target = $region9
  $region8: #{pinn_moe_forward.1} parent=0 // pred_region
    _
  $region9: #{pinn_moe_forward.1} parent=0 // pred_fallthru
    _
  // Predicated region
  $region10: #{pinn_moe_forward.1} parent=0 // pred_check
    _
  $region11: #{pinn_moe_forward.1} parent=0 // pred_check_branch
    %13 = sbr.rel (0) target = $region13
  $region12: #{pinn_moe_forward.1} parent=0 // pred_region
    _
  $region13: #{pinn_moe_forward.1} parent=0 // pred_fallthru
    _
  %v14 = vld [vmem:[%s0] sm:$0xff]
  %v15 = vld [vmem:[%s0 + $0x8] sm:$0x7]
  %v16 = vld [vmem:[%s2] sm:$0xff]
  %v17 = vld [vmem:[%s2 + $0x8] sm:$0xf]
  %19 = vset.pattern.permute.xlu0 0
  %20 = vperm.xlu0 %19, %v16
  %v21 = vpop.permute.xlu0 %20
  %24 = vset.pattern.permute.xlu0 0
  %25 = vperm.xlu0 %24, %v17
  %v26 = vpop.permute.xlu0 %25
  %v28 = vlaneseq
  %v29 = vshrl.u32 %v28, 7
  %v30 = vsub.s32 0, %v29
  %v31 = vrot.slane %v14, %v30
  %v32 = vmul.f32 %v21, %v31
  %v33 = vmul.f32 %v26, %v31
  %v34 = vld [vmem:[%s1] sm:$0xff]
  %v35 = vld [vmem:[%s1 + $0x8] sm:$0xf]
  %vm38 = vcmask 1046528
  %v39 = vrot.slane %v14, 1
  %v40 = vrot.slane %v15, 1
  %v41 = vsel %vm38, %v39, %v40
  %vm43 = vcmask 80896
  %v45 = vsel %vm43, %v34, 0
  %v48 = vsel %vm43, %v35, 0
  %vm50 = vcmask 1041408
  %v51 = vsel %vm50, %v40, 0
  %53 = vmatprep.subr.mxu0 0.0
  %54 = vmatpush1.msra.mxu0 %v41
  %55 = vmatprep.subr.mxu0 0.0
  %56 = vmatpush1.msra.mxu0 %v51
  %57 = vmatprep.subr.mxu0 0.0
  %58 = vmatpush1.msra.mxu0 0.0
  %59 = vmatprep.subr.mxu0 0.0
  %60 = vmatpush1.msra.mxu0 0.0
  %61 = vmatprep.subr.mxu0 0.0
  %62 = vmatpush1.msra.mxu0 0.0
  %63 = vmatprep.subr.mxu0 0.0
  %64 = vmatpush1.msra.mxu0 0.0
  %65 = vmatprep.subr.mxu0 0.0
  %66 = vmatpush1.msra.mxu0 0.0
  %67 = vmatprep.subr.mxu0 0.0
  %68 = vmatpush1.msra.mxu0 0.0
  %69 = vmatprep.subr.mxu0 0.0
  %70 = vmatpush1.msra.mxu0 0.0
  %71 = vmatprep.subr.mxu0 0.0
  %72 = vmatpush1.msra.mxu0 0.0
  %73 = vmatprep.subr.mxu0 0.0
  %74 = vmatpush1.msra.mxu0 0.0
  %75 = vmatprep.subr.mxu0 0.0
  %76 = vmatpush1.msra.mxu0 0.0
  %77 = vmatprep.subr.mxu0 0.0
  %78 = vmatpush1.msra.mxu0 0.0
  %79 = vmatprep.subr.mxu0 0.0
  %80 = vmatpush1.msra.mxu0 0.0
  %81 = vmatprep.subr.mxu0 0.0
  %82 = vmatpush1.msra.mxu0 0.0
  %83 = vmatprep.subr.mxu0 0.0
  %84 = vmatpush1.msra.mxu0 0.0
  %85 = vmatprep.subr.mxu0 0.0
  %86 = vmatpush1.msra.mxu0 0.0
  %87 = vmatprep.subr.mxu0 0.0
  %88 = vmatpush1.msra.mxu0 0.0
  %89 = vmatprep.subr.mxu0 0.0
  %90 = vmatpush1.msra.mxu0 0.0
  %91 = vmatprep.subr.mxu0 0.0
  %92 = vmatpush1.msra.mxu0 0.0
  %93 = vmatprep.subr.mxu0 0.0
  %94 = vmatpush1.msra.mxu0 0.0
  %95 = vmatprep.subr.mxu0 0.0
  %96 = vmatpush1.msra.mxu0 0.0
  %97 = vmatprep.subr.mxu0 0.0
  %98 = vmatpush1.msra.mxu0 0.0
  %99 = vmatprep.subr.mxu0 0.0
  %100 = vmatpush1.msra.mxu0 0.0
  %101 = vmatprep.subr.mxu0 0.0
  %102 = vmatpush1.msra.mxu0 0.0
  %103 = vmatprep.subr.mxu0 0.0
  %104 = vmatpush1.msra.mxu0 0.0
  %105 = vmatprep.subr.mxu0 0.0
  %106 = vmatpush1.msra.mxu0 0.0
  %107 = vmatprep.subr.mxu0 0.0
  %108 = vmatpush1.msra.mxu0 0.0
  %109 = vmatprep.subr.mxu0 0.0
  %110 = vmatpush1.msra.mxu0 0.0
  %111 = vmatprep.subr.mxu0 0.0
  %112 = vmatpush1.msra.mxu0 0.0
  %113 = vmatprep.subr.mxu0 0.0
  %114 = vmatpush1.msra.mxu0 0.0
  %115 = vmatprep.subr.mxu0 0.0
  %116 = vmatpush1.msra.mxu0 0.0
  %117 = vmatprep.mubr.f32.mxu0 0.0
  %118 = vmatmul.mubr.f32.gmra.mrb[0].mxu0 %v45
  %v119 = vpop.f32.mrb[0].mxu0
  %v120 = vadd.f32 0.0, %v119
  %v121 = vpop.f32.mrb[0].mxu0
  %122 = vmatprep.mubr.f32.mxu0 0.0
  %123 = vmatmul.mubr.f32.gmra.mrb[0].mxu0 %v48
  %v124 = vpop.f32.mrb[0].mxu0
  %v125 = vadd.f32 0.0, %v124
  %v126 = vpop.f32.mrb[0].mxu0
  %127 = vdwg.mxu0
  %v128 = vadd.f32 %v32, %v120
  %v129 = vadd.f32 %v33, %v125
  %v130 = vld [vmem:[%s2 + $0x10] sm:$0xff]
  %v131 = vld [vmem:[%s2 + $0x18] sm:$0xf]
  %133 = vset.pattern.permute.xlu0 0
  %134 = vperm.xlu0 %133, %v130
  %v135 = vpop.permute.xlu0 %134
  %138 = vset.pattern.permute.xlu0 0
  %139 = vperm.xlu0 %138, %v131
  %v140 = vpop.permute.xlu0 %139
  %v142 = vadd.f32 %v128, %v135
  %v143 = vadd.f32 %v129, %v140
  %v144 = vmax.f32 %v142, 0.0
  %v145 = vmax.f32 %v143, 0.0
  %v146 = vld [vmem:[%s1 + $0x10] sm:$0xff]
  %v147 = vld [vmem:[%s1 + $0x18] sm:$0xff]
  %v148 = vld [vmem:[%s1 + $0x20] sm:$0xff]
  %v149 = vld [vmem:[%s2 + $0x20] sm:$0xff]
  %v150 = vld [vmem:[%s2 + $0x28] sm:$0xff]
  %v151 = vld [vmem:[%s2 + $0x30] sm:$0xff]
  %153 = vset.pattern.permute.xlu0 0
  %154 = vperm.xlu0 %153, %v149
  %v155 = vpop.permute.xlu0 %154
  %158 = vset.pattern.permute.xlu0 0
  %159 = vperm.xlu0 %158, %v150
  %v160 = vpop.permute.xlu0 %159
  %163 = vset.pattern.permute.xlu0 0
  %164 = vperm.xlu0 %163, %v151
  %v165 = vpop.permute.xlu0 %164
  %vm167 = vcmask 97280
  %v169 = vsel %vm167, %v146, 0
  %v172 = vsel %vm167, %v147, 0
  %v175 = vsel %vm167, %v148, 0
  %vm177 = vcmask 1043456
  %v179 = vsel %vm177, %v145, 0
  %181 = vmatprep.subr.mxu0 0.0
  %182 = vmatpush1.msra.mxu0 %v144
  %183 = vmatprep.subr.mxu0 0.0
  %184 = vmatpush1.msra.mxu0 %v179
  %185 = vmatprep.subr.mxu0 0.0
  %186 = vmatpush1.msra.mxu0 0.0
  %187 = vmatprep.subr.mxu0 0.0
  %188 = vmatpush1.msra.mxu0 0.0
  %189 = vmatprep.subr.mxu0 0.0
  %190 = vmatpush1.msra.mxu0 0.0
  %191 = vmatprep.subr.mxu0 0.0
  %192 = vmatpush1.msra.mxu0 0.0
  %193 = vmatprep.subr.mxu0 0.0
  %194 = vmatpush1.msra.mxu0 0.0
  %195 = vmatprep.subr.mxu0 0.0
  %196 = vmatpush1.msra.mxu0 0.0
  %197 = vmatprep.subr.mxu0 0.0
  %198 = vmatpush1.msra.mxu0 0.0
  %199 = vmatprep.subr.mxu0 0.0
  %200 = vmatpush1.msra.mxu0 0.0
  %201 = vmatprep.subr.mxu0 0.0
  %202 = vmatpush1.msra.mxu0 0.0
  %203 = vmatprep.subr.mxu0 0.0
  %204 = vmatpush1.msra.mxu0 0.0
  %205 = vmatprep.subr.mxu0 0.0
  %206 = vmatpush1.msra.mxu0 0.0
  %207 = vmatprep.subr.mxu0 0.0
  %208 = vmatpush1.msra.mxu0 0.0
  %209 = vmatprep.subr.mxu0 0.0
  %210 = vmatpush1.msra.mxu0 0.0
  %211 = vmatprep.subr.mxu0 0.0
  %212 = vmatpush1.msra.mxu0 0.0
  %213 = vmatprep.subr.mxu0 0.0
  %214 = vmatpush1.msra.mxu0 0.0
  %215 = vmatprep.subr.mxu0 0.0
  %216 = vmatpush1.msra.mxu0 0.0
  %217 = vmatprep.subr.mxu0 0.0
  %218 = vmatpush1.msra.mxu0 0.0
  %219 = vmatprep.subr.mxu0 0.0
  %220 = vmatpush1.msra.mxu0 0.0
  %221 = vmatprep.subr.mxu0 0.0
  %222 = vmatpush1.msra.mxu0 0.0
  %223 = vmatprep.subr.mxu0 0.0
  %224 = vmatpush1.msra.mxu0 0.0
  %225 = vmatprep.subr.mxu0 0.0
  %226 = vmatpush1.msra.mxu0 0.0
  %227 = vmatprep.subr.mxu0 0.0
  %228 = vmatpush1.msra.mxu0 0.0
  %229 = vmatprep.subr.mxu0 0.0
  %230 = vmatpush1.msra.mxu0 0.0
  %231 = vmatprep.subr.mxu0 0.0
  %232 = vmatpush1.msra.mxu0 0.0
  %233 = vmatprep.subr.mxu0 0.0
  %234 = vmatpush1.msra.mxu0 0.0
  %235 = vmatprep.subr.mxu0 0.0
  %236 = vmatpush1.msra.mxu0 0.0
  %237 = vmatprep.subr.mxu0 0.0
  %238 = vmatpush1.msra.mxu0 0.0
  %239 = vmatprep.subr.mxu0 0.0
  %240 = vmatpush1.msra.mxu0 0.0
  %241 = vmatprep.subr.mxu0 0.0
  %242 = vmatpush1.msra.mxu0 0.0
  %243 = vmatprep.subr.mxu0 0.0
  %244 = vmatpush1.msra.mxu0 0.0
  %245 = vmatprep.mubr.f32.mxu0 0.0
  %246 = vmatmul.mubr.f32.gmra.mrb[0].mxu0 %v169
  %v247 = vpop.f32.mrb[0].mxu0
  %v248 = vadd.f32 %v155, %v247
  %v249 = vpop.f32.mrb[0].mxu0
  %250 = vmatprep.mubr.f32.mxu0 0.0
  %251 = vmatmul.mubr.f32.gmra.mrb[0].mxu0 %v172
  %v252 = vpop.f32.mrb[0].mxu0
  %v253 = vadd.f32 %v160, %v252
  %v254 = vpop.f32.mrb[0].mxu0
  %255 = vmatprep.mubr.f32.mxu0 0.0
  %256 = vmatmul.mubr.f32.gmra.mrb[0].mxu0 %v175
  %v257 = vpop.f32.mrb[0].mxu0
  %v258 = vadd.f32 %v165, %v257
  %v259 = vpop.f32.mrb[0].mxu0
  %260 = vdwg.mxu0
  %v261 = vmax.f32 %v248, 0.0
  %v262 = vmax.f32 %v253, 0.0
  %v263 = vmax.f32 %v258, 0.0
  %v264 = vld [vmem:[%s1 + $0x28] sm:$0xff]
  %v265 = vld [vmem:[%s1 + $0x30] sm:$0xff]
  %v266 = vld [vmem:[%s1 + $0x38] sm:$0xff]
  %v267 = vld [vmem:[%s1 + $0x40] sm:$0xff]
  %v268 = vld [vmem:[%s1 + $0x48] sm:$0xff]
  %v269 = vld [vmem:[%s1 + $0x50] sm:$0xff]
  %v270 = vld [vmem:[%s2 + $0x38] sm:$0xff]
  %v271 = vld [vmem:[%s2 + $0x40] sm:$0xff]
  %v272 = vld [vmem:[%s2 + $0x48] sm:$0xff]
  %v273 = vld [vmem:[%s2 + $0x50] sm:$0xff]
  %v274 = vld [vmem:[%s2 + $0x58] sm:$0xff]
  %v275 = vld [vmem:[%s2 + $0x60] sm:$0xff]
  %277 = vset.pattern.permute.xlu0 0
  %278 = vperm.xlu0 %277, %v270
  %v279 = vpop.permute.xlu0 %278
  %282 = vset.pattern.permute.xlu0 0
  %283 = vperm.xlu0 %282, %v271
  %v284 = vpop.permute.xlu0 %283
  %287 = vset.pattern.permute.xlu0 0
  %288 = vperm.xlu0 %287, %v272
  %v289 = vpop.permute.xlu0 %288
  %292 = vset.pattern.permute.xlu0 0
  %293 = vperm.xlu0 %292, %v273
  %v294 = vpop.permute.xlu0 %293
  %297 = vset.pattern.permute.xlu0 0
  %298 = vperm.xlu0 %297, %v274
  %v299 = vpop.permute.xlu0 %298
  %302 = vset.pattern.permute.xlu0 0
  %303 = vperm.xlu0 %302, %v275
  %v304 = vpop.permute.xlu0 %303
  %vm306 = vcmask 195584
  %v308 = vsel %vm306, %v264, 0
  %v311 = vsel %vm306, %v265, 0
  %v314 = vsel %vm306, %v266, 0
  %v317 = vsel %vm306, %v267, 0
  %v320 = vsel %vm306, %v268, 0
  %v323 = vsel %vm306, %v269, 0
  %325 = vmatprep.subr.mxu0 0.0
  %326 = vmatpush1.msra.mxu0 %v261
  %327 = vmatprep.subr.mxu0 0.0
  %328 = vmatpush1.msra.mxu0 %v262
  %329 = vmatprep.subr.mxu0 0.0
  %330 = vmatpush1.msra.mxu0 %v263
  %331 = vmatprep.subr.mxu0 0.0
  %332 = vmatpush1.msra.mxu0 0.0
  %333 = vmatprep.subr.mxu0 0.0
  %334 = vmatpush1.msra.mxu0 0.0
  %335 = vmatprep.subr.mxu0 0.0
  %336 = vmatpush1.msra.mxu0 0.0
  %337 = vmatprep.subr.mxu0 0.0
  %338 = vmatpush1.msra.mxu0 0.0
  %339 = vmatprep.subr.mxu0 0.0
  %340 = vmatpush1.msra.mxu0 0.0
  %341 = vmatprep.subr.mxu0 0.0
  %342 = vmatpush1.msra.mxu0 0.0
  %343 = vmatprep.subr.mxu0 0.0
  %344 = vmatpush1.msra.mxu0 0.0
  %345 = vmatprep.subr.mxu0 0.0
  %346 = vmatpush1.msra.mxu0 0.0
  %347 = vmatprep.subr.mxu0 0.0
  %348 = vmatpush1.msra.mxu0 0.0
  %349 = vmatprep.subr.mxu0 0.0
  %350 = vmatpush1.msra.mxu0 0.0
  %351 = vmatprep.subr.mxu0 0.0
  %352 = vmatpush1.msra.mxu0 0.0
  %353 = vmatprep.subr.mxu0 0.0
  %354 = vmatpush1.msra.mxu0 0.0
  %355 = vmatprep.subr.mxu0 0.0
  %356 = vmatpush1.msra.mxu0 0.0
  %357 = vmatprep.subr.mxu0 0.0
  %358 = vmatpush1.msra.mxu0 0.0
  %359 = vmatprep.subr.mxu0 0.0
  %360 = vmatpush1.msra.mxu0 0.0
  %361 = vmatprep.subr.mxu0 0.0
  %362 = vmatpush1.msra.mxu0 0.0
  %363 = vmatprep.subr.mxu0 0.0
  %364 = vmatpush1.msra.mxu0 0.0
  %365 = vmatprep.subr.mxu0 0.0
  %366 = vmatpush1.msra.mxu0 0.0
  %367 = vmatprep.subr.mxu0 0.0
  %368 = vmatpush1.msra.mxu0 0.0
  %369 = vmatprep.subr.mxu0 0.0
  %370 = vmatpush1.msra.mxu0 0.0
  %371 = vmatprep.subr.mxu0 0.0
  %372 = vmatpush1.msra.mxu0 0.0
  %373 = vmatprep.subr.mxu0 0.0
  %374 = vmatpush1.msra.mxu0 0.0
  %375 = vmatprep.subr.mxu0 0.0
  %376 = vmatpush1.msra.mxu0 0.0
  %377 = vmatprep.subr.mxu0 0.0
  %378 = vmatpush1.msra.mxu0 0.0
  %379 = vmatprep.subr.mxu0 0.0
  %380 = vmatpush1.msra.mxu0 0.0
  %381 = vmatprep.subr.mxu0 0.0
  %382 = vmatpush1.msra.mxu0 0.0
  %383 = vmatprep.subr.mxu0 0.0
  %384 = vmatpush1.msra.mxu0 0.0
  %385 = vmatprep.subr.mxu0 0.0
  %386 = vmatpush1.msra.mxu0 0.0
  %387 = vmatprep.subr.mxu0 0.0
  %388 = vmatpush1.msra.mxu0 0.0
  %389 = vmatprep.mubr.f32.mxu0 0.0
  %390 = vmatmul.mubr.f32.gmra.mrb[0].mxu0 %v308
  %v391 = vpop.f32.mrb[0].mxu0
  %v392 = vadd.f32 %v279, %v391
  %v393 = vpop.f32.mrb[0].mxu0
  %394 = vmatprep.mubr.f32.mxu0 0.0
  %395 = vmatmul.mubr.f32.gmra.mrb[0].mxu0 %v311
  %v396 = vpop.f32.mrb[0].mxu0
  %v397 = vadd.f32 %v284, %v396
  %v398 = vpop.f32.mrb[0].mxu0
  %399 = vmatprep.mubr.f32.mxu0 0.0
  %400 = vmatmul.mubr.f32.gmra.mrb[0].mxu0 %v314
  %v401 = vpop.f32.mrb[0].mxu0
  %v402 = vadd.f32 %v289, %v401
  %v403 = vpop.f32.mrb[0].mxu0
  %404 = vmatprep.mubr.f32.mxu0 0.0
  %405 = vmatmul.mubr.f32.gmra.mrb[0].mxu0 %v317
  %v406 = vpop.f32.mrb[0].mxu0
  %v407 = vadd.f32 %v294, %v406
  %v408 = vpop.f32.mrb[0].mxu0
  %409 = vmatprep.mubr.f32.mxu0 0.0
  %410 = vmatmul.mubr.f32.gmra.mrb[0].mxu0 %v320
  %v411 = vpop.f32.mrb[0].mxu0
  %v412 = vadd.f32 %v299, %v411
  %v413 = vpop.f32.mrb[0].mxu0
  %414 = vmatprep.mubr.f32.mxu0 0.0
  %415 = vmatmul.mubr.f32.gmra.mrb[0].mxu0 %v323
  %v416 = vpop.f32.mrb[0].mxu0
  %v417 = vadd.f32 %v304, %v416
  %v418 = vpop.f32.mrb[0].mxu0
  %419 = vdwg.mxu0
  %v420 = vmax.f32 %v392, 0.0
  %v421 = vmax.f32 %v397, 0.0
  %v422 = vmax.f32 %v402, 0.0
  %v423 = vmax.f32 %v407, 0.0
  %v424 = vmax.f32 %v412, 0.0
  %v425 = vmax.f32 %v417, 0.0
  %v426 = vld [vmem:[%s1 + $0x58] sm:$0xff]
  %v427 = vld [vmem:[%s1 + $0x60] sm:$0xff]
  %v428 = vld [vmem:[%s1 + $0x68] sm:$0xff]
  %v429 = vld [vmem:[%s2 + $0x68] sm:$0xff]
  %v430 = vld [vmem:[%s2 + $0x70] sm:$0xff]
  %v431 = vld [vmem:[%s2 + $0x78] sm:$0xff]
  %433 = vset.pattern.permute.xlu0 0
  %434 = vperm.xlu0 %433, %v429
  %v435 = vpop.permute.xlu0 %434
  %438 = vset.pattern.permute.xlu0 0
  %439 = vperm.xlu0 %438, %v430
  %v440 = vpop.permute.xlu0 %439
  %443 = vset.pattern.permute.xlu0 0
  %444 = vperm.xlu0 %443, %v431
  %v445 = vpop.permute.xlu0 %444
  %vm447 = vcmask 392192
  %v449 = vsel %vm447, %v426, 0
  %v452 = vsel %vm447, %v427, 0
  %v455 = vsel %vm447, %v428, 0
  %457 = vmatprep.subr.mxu0 0.0
  %458 = vmatpush1.msra.mxu0 %v420
  %459 = vmatprep.subr.mxu0 0.0
  %460 = vmatpush1.msra.mxu0 %v421
  %461 = vmatprep.subr.mxu0 0.0
  %462 = vmatpush1.msra.mxu0 %v422
  %463 = vmatprep.subr.mxu0 0.0
  %464 = vmatpush1.msra.mxu0 %v423
  %465 = vmatprep.subr.mxu0 0.0
  %466 = vmatpush1.msra.mxu0 %v424
  %467 = vmatprep.subr.mxu0 0.0
  %468 = vmatpush1.msra.mxu0 %v425
  %469 = vmatprep.subr.mxu0 0.0
  %470 = vmatpush1.msra.mxu0 0.0
  %471 = vmatprep.subr.mxu0 0.0
  %472 = vmatpush1.msra.mxu0 0.0
  %473 = vmatprep.subr.mxu0 0.0
  %474 = vmatpush1.msra.mxu0 0.0
  %475 = vmatprep.subr.mxu0 0.0
  %476 = vmatpush1.msra.mxu0 0.0
  %477 = vmatprep.subr.mxu0 0.0
  %478 = vmatpush1.msra.mxu0 0.0
  %479 = vmatprep.subr.mxu0 0.0
  %480 = vmatpush1.msra.mxu0 0.0
  %481 = vmatprep.subr.mxu0 0.0
  %482 = vmatpush1.msra.mxu0 0.0
  %483 = vmatprep.subr.mxu0 0.0
  %484 = vmatpush1.msra.mxu0 0.0
  %485 = vmatprep.subr.mxu0 0.0
  %486 = vmatpush1.msra.mxu0 0.0
  %487 = vmatprep.subr.mxu0 0.0
  %488 = vmatpush1.msra.mxu0 0.0
  %489 = vmatprep.subr.mxu0 0.0
  %490 = vmatpush1.msra.mxu0 0.0
  %491 = vmatprep.subr.mxu0 0.0
  %492 = vmatpush1.msra.mxu0 0.0
  %493 = vmatprep.subr.mxu0 0.0
  %494 = vmatpush1.msra.mxu0 0.0
  %495 = vmatprep.subr.mxu0 0.0
  %496 = vmatpush1.msra.mxu0 0.0
  %497 = vmatprep.subr.mxu0 0.0
  %498 = vmatpush1.msra.mxu0 0.0
  %499 = vmatprep.subr.mxu0 0.0
  %500 = vmatpush1.msra.mxu0 0.0
  %501 = vmatprep.subr.mxu0 0.0
  %502 = vmatpush1.msra.mxu0 0.0
  %503 = vmatprep.subr.mxu0 0.0
  %504 = vmatpush1.msra.mxu0 0.0
  %505 = vmatprep.subr.mxu0 0.0
  %506 = vmatpush1.msra.mxu0 0.0
  %507 = vmatprep.subr.mxu0 0.0
  %508 = vmatpush1.msra.mxu0 0.0
  %509 = vmatprep.subr.mxu0 0.0
  %510 = vmatpush1.msra.mxu0 0.0
  %511 = vmatprep.subr.mxu0 0.0
  %512 = vmatpush1.msra.mxu0 0.0
  %513 = vmatprep.subr.mxu0 0.0
  %514 = vmatpush1.msra.mxu0 0.0
  %515 = vmatprep.subr.mxu0 0.0
  %516 = vmatpush1.msra.mxu0 0.0
  %517 = vmatprep.subr.mxu0 0.0
  %518 = vmatpush1.msra.mxu0 0.0
  %519 = vmatprep.subr.mxu0 0.0
  %520 = vmatpush1.msra.mxu0 0.0
  %521 = vmatprep.mubr.f32.mxu0 0.0
  %522 = vmatmul.mubr.f32.gmra.mrb[0].mxu0 %v449
  %v523 = vpop.f32.mrb[0].mxu0
  %v524 = vadd.f32 %v435, %v523
  %v525 = vpop.f32.mrb[0].mxu0
  %526 = vmatprep.mubr.f32.mxu0 0.0
  %527 = vmatmul.mubr.f32.gmra.mrb[0].mxu0 %v452
  %v528 = vpop.f32.mrb[0].mxu0
  %v529 = vadd.f32 %v440, %v528
  %v530 = vpop.f32.mrb[0].mxu0
  %531 = vmatprep.mubr.f32.mxu0 0.0
  %532 = vmatmul.mubr.f32.gmra.mrb[0].mxu0 %v455
  %v533 = vpop.f32.mrb[0].mxu0
  %v534 = vadd.f32 %v445, %v533
  %v535 = vpop.f32.mrb[0].mxu0
  %536 = vdwg.mxu0
  %v537 = vmax.f32 %v524, 0.0
  %v538 = vmax.f32 %v529, 0.0
  %v539 = vmax.f32 %v534, 0.0
  %v540 = vld [vmem:[%s1 + $0x70] sm:$0x3f]
  %v541 = vld [vmem:[%s2 + $0x80] sm:$0x3f]
  %543 = vset.pattern.permute.xlu0 0
  %544 = vperm.xlu0 %543, %v541
  %v545 = vpop.permute.xlu0 %544
  %v548 = vsel %vm306, %v540, 0
  %550 = vmatprep.subr.mxu0 0.0
  %551 = vmatpush1.msra.mxu0 %v537
  %552 = vmatprep.subr.mxu0 0.0
  %553 = vmatpush1.msra.mxu0 %v538
  %554 = vmatprep.subr.mxu0 0.0
  %555 = vmatpush1.msra.mxu0 %v539
  %556 = vmatprep.subr.mxu0 0.0
  %557 = vmatpush1.msra.mxu0 0.0
  %558 = vmatprep.subr.mxu0 0.0
  %559 = vmatpush1.msra.mxu0 0.0
  %560 = vmatprep.subr.mxu0 0.0
  %561 = vmatpush1.msra.mxu0 0.0
  %562 = vmatprep.subr.mxu0 0.0
  %563 = vmatpush1.msra.mxu0 0.0
  %564 = vmatprep.subr.mxu0 0.0
  %565 = vmatpush1.msra.mxu0 0.0
  %566 = vmatprep.subr.mxu0 0.0
  %567 = vmatpush1.msra.mxu0 0.0
  %568 = vmatprep.subr.mxu0 0.0
  %569 = vmatpush1.msra.mxu0 0.0
  %570 = vmatprep.subr.mxu0 0.0
  %571 = vmatpush1.msra.mxu0 0.0
  %572 = vmatprep.subr.mxu0 0.0
  %573 = vmatpush1.msra.mxu0 0.0
  %574 = vmatprep.subr.mxu0 0.0
  %575 = vmatpush1.msra.mxu0 0.0
  %576 = vmatprep.subr.mxu0 0.0
  %577 = vmatpush1.msra.mxu0 0.0
  %578 = vmatprep.subr.mxu0 0.0
  %579 = vmatpush1.msra.mxu0 0.0
  %580 = vmatprep.subr.mxu0 0.0
  %581 = vmatpush1.msra.mxu0 0.0
  %582 = vmatprep.subr.mxu0 0.0
  %583 = vmatpush1.msra.mxu0 0.0
  %584 = vmatprep.subr.mxu0 0.0
  %585 = vmatpush1.msra.mxu0 0.0
  %586 = vmatprep.subr.mxu0 0.0
  %587 = vmatpush1.msra.mxu0 0.0
  %588 = vmatprep.subr.mxu0 0.0
  %589 = vmatpush1.msra.mxu0 0.0
  %590 = vmatprep.subr.mxu0 0.0
  %591 = vmatpush1.msra.mxu0 0.0
  %592 = vmatprep.subr.mxu0 0.0
  %593 = vmatpush1.msra.mxu0 0.0
  %594 = vmatprep.subr.mxu0 0.0
  %595 = vmatpush1.msra.mxu0 0.0
  %596 = vmatprep.subr.mxu0 0.0
  %597 = vmatpush1.msra.mxu0 0.0
  %598 = vmatprep.subr.mxu0 0.0
  %599 = vmatpush1.msra.mxu0 0.0
  %600 = vmatprep.subr.mxu0 0.0
  %601 = vmatpush1.msra.mxu0 0.0
  %602 = vmatprep.subr.mxu0 0.0
  %603 = vmatpush1.msra.mxu0 0.0
  %604 = vmatprep.subr.mxu0 0.0
  %605 = vmatpush1.msra.mxu0 0.0
  %606 = vmatprep.subr.mxu0 0.0
  %607 = vmatpush1.msra.mxu0 0.0
  %608 = vmatprep.subr.mxu0 0.0
  %609 = vmatpush1.msra.mxu0 0.0
  %610 = vmatprep.subr.mxu0 0.0
  %611 = vmatpush1.msra.mxu0 0.0
  %612 = vmatprep.subr.mxu0 0.0
  %613 = vmatpush1.msra.mxu0 0.0
  %614 = vmatprep.mubr.f32.mxu0 0.0
  %615 = vmatmul.mubr.f32.gmra.mrb[0].mxu0 %v548
  %v616 = vpop.f32.mrb[0].mxu0
  %v617 = vadd.f32 %v545, %v616
  %v618 = vpop.f32.mrb[0].mxu0
  %619 = vdwg.mxu0
  %vm620 = vcmp.gt.f32.partialorder %v142, 0.0
  %v621 = vsel %vm620, %v21, 0.0
  %vm622 = vcmp.gt.f32.partialorder %v248, 0.0
  %vm623 = vcmp.gt.f32.partialorder %v253, 0.0
  %v624 = vld [vmem:[%s1 + $0x78] sm:$0xff]
  %v625 = vld [vmem:[%s1 + $0x80] sm:$0xff]
  %vm626 = vcmask 64512
  %v628 = vsel %vm626, %v624, 0
  %v631 = vsel %vm626, %v625, 0
  %633 = vmatprep.subr.mxu0 0.0
  %634 = vmatpush1.msra.mxu0 %v621
  %635 = vmatprep.subr.mxu0 0.0
  %636 = vmatpush1.msra.mxu0 0.0
  %637 = vmatprep.subr.mxu0 0.0
  %638 = vmatpush1.msra.mxu0 0.0
  %639 = vmatprep.subr.mxu0 0.0
  %640 = vmatpush1.msra.mxu0 0.0
  %641 = vmatprep.subr.mxu0 0.0
  %642 = vmatpush1.msra.mxu0 0.0
  %643 = vmatprep.subr.mxu0 0.0
  %644 = vmatpush1.msra.mxu0 0.0
  %645 = vmatprep.subr.mxu0 0.0
  %646 = vmatpush1.msra.mxu0 0.0
  %647 = vmatprep.subr.mxu0 0.0
  %648 = vmatpush1.msra.mxu0 0.0
  %649 = vmatprep.subr.mxu0 0.0
  %650 = vmatpush1.msra.mxu0 0.0
  %651 = vmatprep.subr.mxu0 0.0
  %652 = vmatpush1.msra.mxu0 0.0
  %653 = vmatprep.subr.mxu0 0.0
  %654 = vmatpush1.msra.mxu0 0.0
  %655 = vmatprep.subr.mxu0 0.0
  %656 = vmatpush1.msra.mxu0 0.0
  %657 = vmatprep.subr.mxu0 0.0
  %658 = vmatpush1.msra.mxu0 0.0
  %659 = vmatprep.subr.mxu0 0.0
  %660 = vmatpush1.msra.mxu0 0.0
  %661 = vmatprep.subr.mxu0 0.0
  %662 = vmatpush1.msra.mxu0 0.0
  %663 = vmatprep.subr.mxu0 0.0
  %664 = vmatpush1.msra.mxu0 0.0
  %665 = vmatprep.subr.mxu0 0.0
  %666 = vmatpush1.msra.mxu0 0.0
  %667 = vmatprep.subr.mxu0 0.0
  %668 = vmatpush1.msra.mxu0 0.0
  %669 = vmatprep.subr.mxu0 0.0
  %670 = vmatpush1.msra.mxu0 0.0
  %671 = vmatprep.subr.mxu0 0.0
  %672 = vmatpush1.msra.mxu0 0.0
  %673 = vmatprep.subr.mxu0 0.0
  %674 = vmatpush1.msra.mxu0 0.0
  %675 = vmatprep.subr.mxu0 0.0
  %676 = vmatpush1.msra.mxu0 0.0
  %677 = vmatprep.subr.mxu0 0.0
  %678 = vmatpush1.msra.mxu0 0.0
  %679 = vmatprep.subr.mxu0 0.0
  %680 = vmatpush1.msra.mxu0 0.0
  %681 = vmatprep.subr.mxu0 0.0
  %682 = vmatpush1.msra.mxu0 0.0
  %683 = vmatprep.subr.mxu0 0.0
  %684 = vmatpush1.msra.mxu0 0.0
  %685 = vmatprep.subr.mxu0 0.0
  %686 = vmatpush1.msra.mxu0 0.0
  %687 = vmatprep.subr.mxu0 0.0
  %688 = vmatpush1.msra.mxu0 0.0
  %689 = vmatprep.subr.mxu0 0.0
  %690 = vmatpush1.msra.mxu0 0.0
  %691 = vmatprep.subr.mxu0 0.0
  %692 = vmatpush1.msra.mxu0 0.0
  %693 = vmatprep.subr.mxu0 0.0
  %694 = vmatpush1.msra.mxu0 0.0
  %695 = vmatprep.subr.mxu0 0.0
  %696 = vmatpush1.msra.mxu0 0.0
  %697 = vmatprep.mubr.f32.mxu0 0.0
  %698 = vmatmul.mubr.f32.gmra.mrb[0].mxu0 %v628
  %v699 = vpop.f32.mrb[0].mxu0
  %v700 = vadd.f32 0.0, %v699
  %v701 = vpop.f32.mrb[0].mxu0
  %702 = vmatprep.mubr.f32.mxu0 0.0
  %703 = vmatmul.mubr.f32.gmra.mrb[0].mxu0 %v631
  %v704 = vpop.f32.mrb[0].mxu0
  %v705 = vadd.f32 0.0, %v704
  %v706 = vpop.f32.mrb[0].mxu0
  %707 = vdwg.mxu0
  %v708 = vsel %vm622, %v700, 0.0
  %v709 = vsel %vm623, %v705, 0.0
  %vm710 = vcmp.gt.f32.partialorder %v392, 0.0
  %vm711 = vcmp.gt.f32.partialorder %v397, 0.0
  %vm712 = vcmp.gt.f32.partialorder %v402, 0.0
  %vm713 = vcmp.gt.f32.partialorder %v407, 0.0
  %v714 = vld [vmem:[%s1 + $0x88] sm:$0xff]
  %v715 = vld [vmem:[%s1 + $0x90] sm:$0xff]
  %v716 = vld [vmem:[%s1 + $0x98] sm:$0xff]
  %v717 = vld [vmem:[%s1 + $0xa0] sm:$0xff]
  %vm718 = vcmask 130048
  %v720 = vsel %vm718, %v714, 0
  %v723 = vsel %vm718, %v715, 0
  %v726 = vsel %vm718, %v716, 0
  %v729 = vsel %vm718, %v717, 0
  %731 = vmatprep.subr.mxu0 0.0
  %732 = vmatpush1.msra.mxu0 %v708
  %733 = vmatprep.subr.mxu0 0.0
  %734 = vmatpush1.msra.mxu0 %v709
  %735 = vmatprep.subr.mxu0 0.0
  %736 = vmatpush1.msra.mxu0 0.0
  %737 = vmatprep.subr.mxu0 0.0
  %738 = vmatpush1.msra.mxu0 0.0
  %739 = vmatprep.subr.mxu0 0.0
  %740 = vmatpush1.msra.mxu0 0.0
  %741 = vmatprep.subr.mxu0 0.0
  %742 = vmatpush1.msra.mxu0 0.0
  %743 = vmatprep.subr.mxu0 0.0
  %744 = vmatpush1.msra.mxu0 0.0
  %745 = vmatprep.subr.mxu0 0.0
  %746 = vmatpush1.msra.mxu0 0.0
  %747 = vmatprep.subr.mxu0 0.0
  %748 = vmatpush1.msra.mxu0 0.0
  %749 = vmatprep.subr.mxu0 0.0
  %750 = vmatpush1.msra.mxu0 0.0
  %751 = vmatprep.subr.mxu0 0.0
  %752 = vmatpush1.msra.mxu0 0.0
  %753 = vmatprep.subr.mxu0 0.0
  %754 = vmatpush1.msra.mxu0 0.0
  %755 = vmatprep.subr.mxu0 0.0
  %756 = vmatpush1.msra.mxu0 0.0
  %757 = vmatprep.subr.mxu0 0.0
  %758 = vmatpush1.msra.mxu0 0.0
  %759 = vmatprep.subr.mxu0 0.0
  %760 = vmatpush1.msra.mxu0 0.0
  %761 = vmatprep.subr.mxu0 0.0
  %762 = vmatpush1.msra.mxu0 0.0
  %763 = vmatprep.subr.mxu0 0.0
  %764 = vmatpush1.msra.mxu0 0.0
  %765 = vmatprep.subr.mxu0 0.0
  %766 = vmatpush1.msra.mxu0 0.0
  %767 = vmatprep.subr.mxu0 0.0
  %768 = vmatpush1.msra.mxu0 0.0
  %769 = vmatprep.subr.mxu0 0.0
  %770 = vmatpush1.msra.mxu0 0.0
  %771 = vmatprep.subr.mxu0 0.0
  %772 = vmatpush1.msra.mxu0 0.0
  %773 = vmatprep.subr.mxu0 0.0
  %774 = vmatpush1.msra.mxu0 0.0
  %775 = vmatprep.subr.mxu0 0.0
  %776 = vmatpush1.msra.mxu0 0.0
  %777 = vmatprep.subr.mxu0 0.0
  %778 = vmatpush1.msra.mxu0 0.0
  %779 = vmatprep.subr.mxu0 0.0
  %780 = vmatpush1.msra.mxu0 0.0
  %781 = vmatprep.subr.mxu0 0.0
  %782 = vmatpush1.msra.mxu0 0.0
  %783 = vmatprep.subr.mxu0 0.0
  %784 = vmatpush1.msra.mxu0 0.0
  %785 = vmatprep.subr.mxu0 0.0
  %786 = vmatpush1.msra.mxu0 0.0
  %787 = vmatprep.subr.mxu0 0.0
  %788 = vmatpush1.msra.mxu0 0.0
  %789 = vmatprep.subr.mxu0 0.0
  %790 = vmatpush1.msra.mxu0 0.0
  %791 = vmatprep.subr.mxu0 0.0
  %792 = vmatpush1.msra.mxu0 0.0
  %793 = vmatprep.subr.mxu0 0.0
  %794 = vmatpush1.msra.mxu0 0.0
  %795 = vmatprep.mubr.f32.mxu0 0.0
  %796 = vmatmul.mubr.f32.gmra.mrb[0].mxu0 %v720
  %v797 = vpop.f32.mrb[0].mxu0
  %v798 = vadd.f32 0.0, %v797
  %v799 = vpop.f32.mrb[0].mxu0
  %800 = vmatprep.mubr.f32.mxu0 0.0
  %801 = vmatmul.mubr.f32.gmra.mrb[0].mxu0 %v723
  %v802 = vpop.f32.mrb[0].mxu0
  %v803 = vadd.f32 0.0, %v802
  %v804 = vpop.f32.mrb[0].mxu0
  %805 = vmatprep.mubr.f32.mxu0 0.0
  %806 = vmatmul.mubr.f32.gmra.mrb[0].mxu0 %v726
  %v807 = vpop.f32.mrb[0].mxu0
  %v808 = vadd.f32 0.0, %v807
  %v809 = vpop.f32.mrb[0].mxu0
  %810 = vmatprep.mubr.f32.mxu0 0.0
  %811 = vmatmul.mubr.f32.gmra.mrb[0].mxu0 %v729
  %v812 = vpop.f32.mrb[0].mxu0
  %v813 = vadd.f32 0.0, %v812
  %v814 = vpop.f32.mrb[0].mxu0
  %815 = vdwg.mxu0
  %v816 = vsel %vm710, %v798, 0.0
  %v817 = vsel %vm711, %v803, 0.0
  %v818 = vsel %vm712, %v808, 0.0
  %v819 = vsel %vm713, %v813, 0.0
  %vm820 = vcmp.gt.f32.partialorder %v524, 0.0
  %vm821 = vcmp.gt.f32.partialorder %v529, 0.0
  %v822 = vld [vmem:[%s1 + $0xa8] sm:$0xff]
  %v823 = vld [vmem:[%s1 + $0xb0] sm:$0xff]
  %vm824 = vcmask 261120
  %v826 = vsel %vm824, %v822, 0
  %v829 = vsel %vm824, %v823, 0
  %831 = vmatprep.subr.mxu0 0.0
  %832 = vmatpush1.msra.mxu0 %v816
  %833 = vmatprep.subr.mxu0 0.0
  %834 = vmatpush1.msra.mxu0 %v817
  %835 = vmatprep.subr.mxu0 0.0
  %836 = vmatpush1.msra.mxu0 %v818
  %837 = vmatprep.subr.mxu0 0.0
  %838 = vmatpush1.msra.mxu0 %v819
  %839 = vmatprep.subr.mxu0 0.0
  %840 = vmatpush1.msra.mxu0 0.0
  %841 = vmatprep.subr.mxu0 0.0
  %842 = vmatpush1.msra.mxu0 0.0
  %843 = vmatprep.subr.mxu0 0.0
  %844 = vmatpush1.msra.mxu0 0.0
  %845 = vmatprep.subr.mxu0 0.0
  %846 = vmatpush1.msra.mxu0 0.0
  %847 = vmatprep.subr.mxu0 0.0
  %848 = vmatpush1.msra.mxu0 0.0
  %849 = vmatprep.subr.mxu0 0.0
  %850 = vmatpush1.msra.mxu0 0.0
  %851 = vmatprep.subr.mxu0 0.0
  %852 = vmatpush1.msra.mxu0 0.0
  %853 = vmatprep.subr.mxu0 0.0
  %854 = vmatpush1.msra.mxu0 0.0
  %855 = vmatprep.subr.mxu0 0.0
  %856 = vmatpush1.msra.mxu0 0.0
  %857 = vmatprep.subr.mxu0 0.0
  %858 = vmatpush1.msra.mxu0 0.0
  %859 = vmatprep.subr.mxu0 0.0
  %860 = vmatpush1.msra.mxu0 0.0
  %861 = vmatprep.subr.mxu0 0.0
  %862 = vmatpush1.msra.mxu0 0.0
  %863 = vmatprep.subr.mxu0 0.0
  %864 = vmatpush1.msra.mxu0 0.0
  %865 = vmatprep.subr.mxu0 0.0
  %866 = vmatpush1.msra.mxu0 0.0
  %867 = vmatprep.subr.mxu0 0.0
  %868 = vmatpush1.msra.mxu0 0.0
  %869 = vmatprep.subr.mxu0 0.0
  %870 = vmatpush1.msra.mxu0 0.0
  %871 = vmatprep.subr.mxu0 0.0
  %872 = vmatpush1.msra.mxu0 0.0
  %873 = vmatprep.subr.mxu0 0.0
  %874 = vmatpush1.msra.mxu0 0.0
  %875 = vmatprep.subr.mxu0 0.0
  %876 = vmatpush1.msra.mxu0 0.0
  %877 = vmatprep.subr.mxu0 0.0
  %878 = vmatpush1.msra.mxu0 0.0
  %879 = vmatprep.subr.mxu0 0.0
  %880 = vmatpush1.msra.mxu0 0.0
  %881 = vmatprep.subr.mxu0 0.0
  %882 = vmatpush1.msra.mxu0 0.0
  %883 = vmatprep.subr.mxu0 0.0
  %884 = vmatpush1.msra.mxu0 0.0
  %885 = vmatprep.subr.mxu0 0.0
  %886 = vmatpush1.msra.mxu0 0.0
  %887 = vmatprep.subr.mxu0 0.0
  %888 = vmatpush1.msra.mxu0 0.0
  %889 = vmatprep.subr.mxu0 0.0
  %890 = vmatpush1.msra.mxu0 0.0
  %891 = vmatprep.subr.mxu0 0.0
  %892 = vmatpush1.msra.mxu0 0.0
  %893 = vmatprep.subr.mxu0 0.0
  %894 = vmatpush1.msra.mxu0 0.0
  %895 = vmatprep.mubr.f32.mxu0 0.0
  %896 = vmatmul.mubr.f32.gmra.mrb[0].mxu0 %v826
  %v897 = vpop.f32.mrb[0].mxu0
  %v898 = vadd.f32 0.0, %v897
  %v899 = vpop.f32.mrb[0].mxu0
  %900 = vmatprep.mubr.f32.mxu0 0.0
  %901 = vmatmul.mubr.f32.gmra.mrb[0].mxu0 %v829
  %v902 = vpop.f32.mrb[0].mxu0
  %v903 = vadd.f32 0.0, %v902
  %v904 = vpop.f32.mrb[0].mxu0
  %905 = vdwg.mxu0
  %v906 = vsel %vm820, %v898, 0.0
  %v907 = vsel %vm821, %v903, 0.0
  %v908 = vld [vmem:[%s1 + $0xb8] sm:$0x3]
  %v910 = vsel %vm718, %v908, 0
  %912 = vmatprep.subr.mxu0 0.0
  %913 = vmatpush1.msra.mxu0 %v906
  %914 = vmatprep.subr.mxu0 0.0
  %915 = vmatpush1.msra.mxu0 %v907
  %916 = vmatprep.subr.mxu0 0.0
  %917 = vmatpush1.msra.mxu0 0.0
  %918 = vmatprep.subr.mxu0 0.0
  %919 = vmatpush1.msra.mxu0 0.0
  %920 = vmatprep.subr.mxu0 0.0
  %921 = vmatpush1.msra.mxu0 0.0
  %922 = vmatprep.subr.mxu0 0.0
  %923 = vmatpush1.msra.mxu0 0.0
  %924 = vmatprep.subr.mxu0 0.0
  %925 = vmatpush1.msra.mxu0 0.0
  %926 = vmatprep.subr.mxu0 0.0
  %927 = vmatpush1.msra.mxu0 0.0
  %928 = vmatprep.subr.mxu0 0.0
  %929 = vmatpush1.msra.mxu0 0.0
  %930 = vmatprep.subr.mxu0 0.0
  %931 = vmatpush1.msra.mxu0 0.0
  %932 = vmatprep.subr.mxu0 0.0
  %933 = vmatpush1.msra.mxu0 0.0
  %934 = vmatprep.subr.mxu0 0.0
  %935 = vmatpush1.msra.mxu0 0.0
  %936 = vmatprep.subr.mxu0 0.0
  %937 = vmatpush1.msra.mxu0 0.0
  %938 = vmatprep.subr.mxu0 0.0
  %939 = vmatpush1.msra.mxu0 0.0
  %940 = vmatprep.subr.mxu0 0.0
  %941 = vmatpush1.msra.mxu0 0.0
  %942 = vmatprep.subr.mxu0 0.0
  %943 = vmatpush1.msra.mxu0 0.0
  %944 = vmatprep.subr.mxu0 0.0
  %945 = vmatpush1.msra.mxu0 0.0
  %946 = vmatprep.subr.mxu0 0.0
  %947 = vmatpush1.msra.mxu0 0.0
  %948 = vmatprep.subr.mxu0 0.0
  %949 = vmatpush1.msra.mxu0 0.0
  %950 = vmatprep.subr.mxu0 0.0
  %951 = vmatpush1.msra.mxu0 0.0
  %952 = vmatprep.subr.mxu0 0.0
  %953 = vmatpush1.msra.mxu0 0.0
  %954 = vmatprep.subr.mxu0 0.0
  %955 = vmatpush1.msra.mxu0 0.0
  %956 = vmatprep.subr.mxu0 0.0
  %957 = vmatpush1.msra.mxu0 0.0
  %958 = vmatprep.subr.mxu0 0.0
  %959 = vmatpush1.msra.mxu0 0.0
  %960 = vmatprep.subr.mxu0 0.0
  %961 = vmatpush1.msra.mxu0 0.0
  %962 = vmatprep.subr.mxu0 0.0
  %963 = vmatpush1.msra.mxu0 0.0
  %964 = vmatprep.subr.mxu0 0.0
  %965 = vmatpush1.msra.mxu0 0.0
  %966 = vmatprep.subr.mxu0 0.0
  %967 = vmatpush1.msra.mxu0 0.0
  %968 = vmatprep.subr.mxu0 0.0
  %969 = vmatpush1.msra.mxu0 0.0
  %970 = vmatprep.subr.mxu0 0.0
  %971 = vmatpush1.msra.mxu0 0.0
  %972 = vmatprep.subr.mxu0 0.0
  %973 = vmatpush1.msra.mxu0 0.0
  %974 = vmatprep.subr.mxu0 0.0
  %975 = vmatpush1.msra.mxu0 0.0
  %976 = vmatprep.mubr.f32.mxu0 0.0
  %977 = vmatmul.mubr.f32.gmra.mrb[0].mxu0 %v910
  %v978 = vpop.f32.mrb[0].mxu0
  %v979 = vadd.f32 0.0, %v978
  %v980 = vpop.f32.mrb[0].mxu0
  %981 = vdwg.mxu0
  %v982 = vld [vmem:[%s2 + $0xc0] sm:$0x1]
  %984 = vset.pattern.permute.xlu0 0
  %985 = vperm.xlu0 %984, %v982
  %v986 = vpop.permute.xlu0 %985
  %v987 = vrot.slane %v986, 7
  %v989 = vsub.f32 %v979, %v987
  %v990 = vmul.f32 %v989, %v989
  %v992 = vrot.slane %v617, 3
  %v994 = vsub.f32 %v979, %v992
  %v995 = vmul.f32 %v994, %v994
  %v997 = vrot.slane %v995, 7
  %v999 = vadd.f32 %v990, %v997
  %v1000 = vmul.f32 %v617, %v617
  %v1002 = vrot.slane %v1000, 4
  %v1004 = vadd.f32 %v999, %v1002
  %v1005 = vld [vmem:[%s1 + $0xc0] sm:$0xff]
  %v1006 = vld [vmem:[%s1 + $0xc8] sm:$0xff]
  %v1007 = vld [vmem:[%s1 + $0xd0] sm:$0xff]
  %v1008 = vld [vmem:[%s1 + $0xd8] sm:$0xff]
  %v1009 = vld [vmem:[%s2 + $0x88] sm:$0xff]
  %v1010 = vld [vmem:[%s2 + $0x90] sm:$0xff]
  %v1011 = vld [vmem:[%s2 + $0x98] sm:$0xff]
  %v1012 = vld [vmem:[%s2 + $0xa0] sm:$0xff]
  %1014 = vset.pattern.permute.xlu0 0
  %1015 = vperm.xlu0 %1014, %v1009
  %v1016 = vpop.permute.xlu0 %1015
  %1019 = vset.pattern.permute.xlu0 0
  %1020 = vperm.xlu0 %1019, %v1010
  %v1021 = vpop.permute.xlu0 %1020
  %1024 = vset.pattern.permute.xlu0 0
  %1025 = vperm.xlu0 %1024, %v1011
  %v1026 = vpop.permute.xlu0 %1025
  %1029 = vset.pattern.permute.xlu0 0
  %1030 = vperm.xlu0 %1029, %v1012
  %v1031 = vpop.permute.xlu0 %1030
  %vm1033 = vcmask 48128
  %v1035 = vsel %vm1033, %v1005, 0
  %v1038 = vsel %vm1033, %v1006, 0
  %v1041 = vsel %vm1033, %v1007, 0
  %v1044 = vsel %vm1033, %v1008, 0
  %vm1046 = vcmask 1045504
  %v1047 = vsel %vm1046, %v617, 0
  %1049 = vmatprep.subr.mxu0 0.0
  %1050 = vmatpush1.msra.mxu0 %v1047
  %1051 = vmatprep.subr.mxu0 0.0
  %1052 = vmatpush1.msra.mxu0 0.0
  %1053 = vmatprep.subr.mxu0 0.0
  %1054 = vmatpush1.msra.mxu0 0.0
  %1055 = vmatprep.subr.mxu0 0.0
  %1056 = vmatpush1.msra.mxu0 0.0
  %1057 = vmatprep.subr.mxu0 0.0
  %1058 = vmatpush1.msra.mxu0 0.0
  %1059 = vmatprep.subr.mxu0 0.0
  %1060 = vmatpush1.msra.mxu0 0.0
  %1061 = vmatprep.subr.mxu0 0.0
  %1062 = vmatpush1.msra.mxu0 0.0
  %1063 = vmatprep.subr.mxu0 0.0
  %1064 = vmatpush1.msra.mxu0 0.0
  %1065 = vmatprep.subr.mxu0 0.0
  %1066 = vmatpush1.msra.mxu0 0.0
  %1067 = vmatprep.subr.mxu0 0.0
  %1068 = vmatpush1.msra.mxu0 0.0
  %1069 = vmatprep.subr.mxu0 0.0
  %1070 = vmatpush1.msra.mxu0 0.0
  %1071 = vmatprep.subr.mxu0 0.0
  %1072 = vmatpush1.msra.mxu0 0.0
  %1073 = vmatprep.subr.mxu0 0.0
  %1074 = vmatpush1.msra.mxu0 0.0
  %1075 = vmatprep.subr.mxu0 0.0
  %1076 = vmatpush1.msra.mxu0 0.0
  %1077 = vmatprep.subr.mxu0 0.0
  %1078 = vmatpush1.msra.mxu0 0.0
  %1079 = vmatprep.subr.mxu0 0.0
  %1080 = vmatpush1.msra.mxu0 0.0
  %1081 = vmatprep.subr.mxu0 0.0
  %1082 = vmatpush1.msra.mxu0 0.0
  %1083 = vmatprep.subr.mxu0 0.0
  %1084 = vmatpush1.msra.mxu0 0.0
  %1085 = vmatprep.subr.mxu0 0.0
  %1086 = vmatpush1.msra.mxu0 0.0
  %1087 = vmatprep.subr.mxu0 0.0
  %1088 = vmatpush1.msra.mxu0 0.0
  %1089 = vmatprep.subr.mxu0 0.0
  %1090 = vmatpush1.msra.mxu0 0.0
  %1091 = vmatprep.subr.mxu0 0.0
  %1092 = vmatpush1.msra.mxu0 0.0
  %1093 = vmatprep.subr.mxu0 0.0
  %1094 = vmatpush1.msra.mxu0 0.0
  %1095 = vmatprep.subr.mxu0 0.0
  %1096 = vmatpush1.msra.mxu0 0.0
  %1097 = vmatprep.subr.mxu0 0.0
  %1098 = vmatpush1.msra.mxu0 0.0
  %1099 = vmatprep.subr.mxu0 0.0
  %1100 = vmatpush1.msra.mxu0 0.0
  %1101 = vmatprep.subr.mxu0 0.0
  %1102 = vmatpush1.msra.mxu0 0.0
  %1103 = vmatprep.subr.mxu0 0.0
  %1104 = vmatpush1.msra.mxu0 0.0
  %1105 = vmatprep.subr.mxu0 0.0
  %1106 = vmatpush1.msra.mxu0 0.0
  %1107 = vmatprep.subr.mxu0 0.0
  %1108 = vmatpush1.msra.mxu0 0.0
  %1109 = vmatprep.subr.mxu0 0.0
  %1110 = vmatpush1.msra.mxu0 0.0
  %1111 = vmatprep.subr.mxu0 0.0
  %1112 = vmatpush1.msra.mxu0 0.0
  %1113 = vmatprep.mubr.f32.mxu0 0.0
  %1114 = vmatmul.mubr.f32.gmra.mrb[0].mxu0 %v1035
  %v1115 = vpop.f32.mrb[0].mxu0
  %v1116 = vadd.f32 %v1016, %v1115
  %v1117 = vpop.f32.mrb[0].mxu0
  %1118 = vmatprep.mubr.f32.mxu0 0.0
  %1119 = vmatmul.mubr.f32.gmra.mrb[0].mxu0 %v1038
  %v1120 = vpop.f32.mrb[0].mxu0
  %v1121 = vadd.f32 %v1021, %v1120
  %v1122 = vpop.f32.mrb[0].mxu0
  %1123 = vmatprep.mubr.f32.mxu0 0.0
  %1124 = vmatmul.mubr.f32.gmra.mrb[0].mxu0 %v1041
  %v1125 = vpop.f32.mrb[0].mxu0
  %v1126 = vadd.f32 %v1026, %v1125
  %v1127 = vpop.f32.mrb[0].mxu0
  %1128 = vmatprep.mubr.f32.mxu0 0.0
  %1129 = vmatmul.mubr.f32.gmra.mrb[0].mxu0 %v1044
  %v1130 = vpop.f32.mrb[0].mxu0
  %v1131 = vadd.f32 %v1031, %v1130
  %v1132 = vpop.f32.mrb[0].mxu0
  %1133 = vdwg.mxu0
  %v1134 = vmax.f32 %v1116, 0.0
  %v1135 = vmax.f32 %v1121, 0.0
  %v1136 = vmax.f32 %v1126, 0.0
  %v1137 = vmax.f32 %v1131, 0.0
  %v1138 = vld [vmem:[%s1 + $0xe0] sm:$0xff]
  %v1139 = vld [vmem:[%s1 + $0xe8] sm:$0xff]
  %v1140 = vld [vmem:[%s2 + $0xa8] sm:$0xff]
  %v1141 = vld [vmem:[%s2 + $0xb0] sm:$0xff]
  %1143 = vset.pattern.permute.xlu0 0
  %1144 = vperm.xlu0 %1143, %v1140
  %v1145 = vpop.permute.xlu0 %1144
  %1148 = vset.pattern.permute.xlu0 0
  %1149 = vperm.xlu0 %1148, %v1141
  %v1150 = vpop.permute.xlu0 %1149
  %v1153 = vsel %vm824, %v1138, 0
  %v1156 = vsel %vm824, %v1139, 0
  %1158 = vmatprep.subr.mxu0 0.0
  %1159 = vmatpush1.msra.mxu0 %v1134
  %1160 = vmatprep.subr.mxu0 0.0
  %1161 = vmatpush1.msra.mxu0 %v1135
  %1162 = vmatprep.subr.mxu0 0.0
  %1163 = vmatpush1.msra.mxu0 %v1136
  %1164 = vmatprep.subr.mxu0 0.0
  %1165 = vmatpush1.msra.mxu0 %v1137
  %1166 = vmatprep.subr.mxu0 0.0
  %1167 = vmatpush1.msra.mxu0 0.0
  %1168 = vmatprep.subr.mxu0 0.0
  %1169 = vmatpush1.msra.mxu0 0.0
  %1170 = vmatprep.subr.mxu0 0.0
  %1171 = vmatpush1.msra.mxu0 0.0
  %1172 = vmatprep.subr.mxu0 0.0
  %1173 = vmatpush1.msra.mxu0 0.0
  %1174 = vmatprep.subr.mxu0 0.0
  %1175 = vmatpush1.msra.mxu0 0.0
  %1176 = vmatprep.subr.mxu0 0.0
  %1177 = vmatpush1.msra.mxu0 0.0
  %1178 = vmatprep.subr.mxu0 0.0
  %1179 = vmatpush1.msra.mxu0 0.0
  %1180 = vmatprep.subr.mxu0 0.0
  %1181 = vmatpush1.msra.mxu0 0.0
  %1182 = vmatprep.subr.mxu0 0.0
  %1183 = vmatpush1.msra.mxu0 0.0
  %1184 = vmatprep.subr.mxu0 0.0
  %1185 = vmatpush1.msra.mxu0 0.0
  %1186 = vmatprep.subr.mxu0 0.0
  %1187 = vmatpush1.msra.mxu0 0.0
  %1188 = vmatprep.subr.mxu0 0.0
  %1189 = vmatpush1.msra.mxu0 0.0
  %1190 = vmatprep.subr.mxu0 0.0
  %1191 = vmatpush1.msra.mxu0 0.0
  %1192 = vmatprep.subr.mxu0 0.0
  %1193 = vmatpush1.msra.mxu0 0.0
  %1194 = vmatprep.subr.mxu0 0.0
  %1195 = vmatpush1.msra.mxu0 0.0
  %1196 = vmatprep.subr.mxu0 0.0
  %1197 = vmatpush1.msra.mxu0 0.0
  %1198 = vmatprep.subr.mxu0 0.0
  %1199 = vmatpush1.msra.mxu0 0.0
  %1200 = vmatprep.subr.mxu0 0.0
  %1201 = vmatpush1.msra.mxu0 0.0
  %1202 = vmatprep.subr.mxu0 0.0
  %1203 = vmatpush1.msra.mxu0 0.0
  %1204 = vmatprep.subr.mxu0 0.0
  %1205 = vmatpush1.msra.mxu0 0.0
  %1206 = vmatprep.subr.mxu0 0.0
  %1207 = vmatpush1.msra.mxu0 0.0
  %1208 = vmatprep.subr.mxu0 0.0
  %1209 = vmatpush1.msra.mxu0 0.0
  %1210 = vmatprep.subr.mxu0 0.0
  %1211 = vmatpush1.msra.mxu0 0.0
  %1212 = vmatprep.subr.mxu0 0.0
  %1213 = vmatpush1.msra.mxu0 0.0
  %1214 = vmatprep.subr.mxu0 0.0
  %1215 = vmatpush1.msra.mxu0 0.0
  %1216 = vmatprep.subr.mxu0 0.0
  %1217 = vmatpush1.msra.mxu0 0.0
  %1218 = vmatprep.subr.mxu0 0.0
  %1219 = vmatpush1.msra.mxu0 0.0
  %1220 = vmatprep.subr.mxu0 0.0
  %1221 = vmatpush1.msra.mxu0 0.0
  %1222 = vmatprep.mubr.f32.mxu0 0.0
  %1223 = vmatmul.mubr.f32.gmra.mrb[0].mxu0 %v1153
  %v1224 = vpop.f32.mrb[0].mxu0
  %v1225 = vadd.f32 %v1145, %v1224
  %v1226 = vpop.f32.mrb[0].mxu0
  %1227 = vmatprep.mubr.f32.mxu0 0.0
  %1228 = vmatmul.mubr.f32.gmra.mrb[0].mxu0 %v1156
  %v1229 = vpop.f32.mrb[0].mxu0
  %v1230 = vadd.f32 %v1150, %v1229
  %v1231 = vpop.f32.mrb[0].mxu0
  %1232 = vdwg.mxu0
  %v1233 = vmax.f32 %v1225, 0.0
  %v1234 = vmax.f32 %v1230, 0.0
  %v1235 = vld [vmem:[%s1 + $0xf0] sm:$0x1]
  %v1236 = vld [vmem:[%s2 + $0xb8] sm:$0x1]
  %1238 = vset.pattern.permute.xlu0 0
  %1239 = vperm.xlu0 %1238, %v1236
  %v1240 = vpop.permute.xlu0 %1239
  %v1243 = vsel %vm718, %v1235, 0
  %1245 = vmatprep.subr.mxu0 0.0
  %1246 = vmatpush1.msra.mxu0 %v1233
  %1247 = vmatprep.subr.mxu0 0.0
  %1248 = vmatpush1.msra.mxu0 %v1234
  %1249 = vmatprep.subr.mxu0 0.0
  %1250 = vmatpush1.msra.mxu0 0.0
  %1251 = vmatprep.subr.mxu0 0.0
  %1252 = vmatpush1.msra.mxu0 0.0
  %1253 = vmatprep.subr.mxu0 0.0
  %1254 = vmatpush1.msra.mxu0 0.0
  %1255 = vmatprep.subr.mxu0 0.0
  %1256 = vmatpush1.msra.mxu0 0.0
  %1257 = vmatprep.subr.mxu0 0.0
  %1258 = vmatpush1.msra.mxu0 0.0
  %1259 = vmatprep.subr.mxu0 0.0
  %1260 = vmatpush1.msra.mxu0 0.0
  %1261 = vmatprep.subr.mxu0 0.0
  %1262 = vmatpush1.msra.mxu0 0.0
  %1263 = vmatprep.subr.mxu0 0.0
  %1264 = vmatpush1.msra.mxu0 0.0
  %1265 = vmatprep.subr.mxu0 0.0
  %1266 = vmatpush1.msra.mxu0 0.0
  %1267 = vmatprep.subr.mxu0 0.0
  %1268 = vmatpush1.msra.mxu0 0.0
  %1269 = vmatprep.subr.mxu0 0.0
  %1270 = vmatpush1.msra.mxu0 0.0
  %1271 = vmatprep.subr.mxu0 0.0
  %1272 = vmatpush1.msra.mxu0 0.0
  %1273 = vmatprep.subr.mxu0 0.0
  %1274 = vmatpush1.msra.mxu0 0.0
  %1275 = vmatprep.subr.mxu0 0.0
  %1276 = vmatpush1.msra.mxu0 0.0
  %1277 = vmatprep.subr.mxu0 0.0
  %1278 = vmatpush1.msra.mxu0 0.0
  %1279 = vmatprep.subr.mxu0 0.0
  %1280 = vmatpush1.msra.mxu0 0.0
  %1281 = vmatprep.subr.mxu0 0.0
  %1282 = vmatpush1.msra.mxu0 0.0
  %1283 = vmatprep.subr.mxu0 0.0
  %1284 = vmatpush1.msra.mxu0 0.0
  %1285 = vmatprep.subr.mxu0 0.0
  %1286 = vmatpush1.msra.mxu0 0.0
  %1287 = vmatprep.subr.mxu0 0.0
  %1288 = vmatpush1.msra.mxu0 0.0
  %1289 = vmatprep.subr.mxu0 0.0
  %1290 = vmatpush1.msra.mxu0 0.0
  %1291 = vmatprep.subr.mxu0 0.0
  %1292 = vmatpush1.msra.mxu0 0.0
  %1293 = vmatprep.subr.mxu0 0.0
  %1294 = vmatpush1.msra.mxu0 0.0
  %1295 = vmatprep.subr.mxu0 0.0
  %1296 = vmatpush1.msra.mxu0 0.0
  %1297 = vmatprep.subr.mxu0 0.0
  %1298 = vmatpush1.msra.mxu0 0.0
  %1299 = vmatprep.subr.mxu0 0.0
  %1300 = vmatpush1.msra.mxu0 0.0
  %1301 = vmatprep.subr.mxu0 0.0
  %1302 = vmatpush1.msra.mxu0 0.0
  %1303 = vmatprep.subr.mxu0 0.0
  %1304 = vmatpush1.msra.mxu0 0.0
  %1305 = vmatprep.subr.mxu0 0.0
  %1306 = vmatpush1.msra.mxu0 0.0
  %1307 = vmatprep.subr.mxu0 0.0
  %1308 = vmatpush1.msra.mxu0 0.0
  %1309 = vmatprep.mubr.f32.mxu0 0.0
  %1310 = vmatmul.mubr.f32.gmra.mrb[0].mxu0 %v1243
  %v1311 = vpop.f32.mrb[0].mxu0
  %v1312 = vadd.f32 %v1240, %v1311
  %v1313 = vpop.f32.mrb[0].mxu0
  %1314 = vdwg.mxu0
  %v1315 = vrot.slane %v617, 6
  %vm1317 = vcmask 1040384
  %v1318 = vsel %vm1317, %v1312, %v1004
  %v1319 = vsel %vm50, %v1318, %v1315
  %1320 = vst [vmem:[%s3] sm:$0xff] %v1319
  // Predicated region
  $region14: #{pinn_moe_forward.1} parent=0 // pred_check
    _
  $region15: #{pinn_moe_forward.1} parent=0 // pred_check_branch
    %1322 = sbr.rel (0) target = $region17
  $region16: #{pinn_moe_forward.1} parent=0 // pred_region
    _
  $region17: #{pinn_moe_forward.1} parent=0 // pred_fallthru
    _
  // Predicated region
  $region18: #{pinn_moe_forward.1} parent=0 // pred_check
    _
  $region19: #{pinn_moe_forward.1} parent=0 // pred_check_branch
    %1324 = sbr.rel (0) target = $region21
  $region20: #{pinn_moe_forward.1} parent=0 // pred_region
    _
  $region21: #{pinn_moe_forward.1} parent=0 // pred_fallthru
    _

</llo_original>
